<compile_context>
chip_gen: v7x
topology: tpu7x:2x2x1
jax: 0.10.0
libtpu: 0.0.40
codegen_flags: <defaults>
</compile_context>

<pallas_src>
import numpy as np
import jax
import jax.numpy as jnp
from jax.experimental import pallas as pl
from jax.experimental.pallas import tpu as pltpu

EPS = 1e-5                       # nn.BatchNorm2d default eps
VMEM_LIMIT = 48 * 1024 * 1024    # stays under v7x's 64 MiB physical VMEM
M_BUDGET = 2048                  # fused-matmul row budget per grid step


def _round_up(x, m):
    return (x + m - 1) // m * m


def _make_conv_stats_pool_kernel(ipg, tph, pw, k, k_pad, c_pad):
    """One grid step: conv3x3 + bias + ReLU for `ipg` images x `tph` pooled rows as ONE
    (ipg*4*tph*pw, k_pad) x (k_pad, c_pad) bf16 MXU matmul (f32 accumulation), then emit
    per-channel sum / sum^2 partials and per-2x2-window max / min of the ReLU output."""
    m4 = tph * pw

    def row_start(c):            # de-interleaved slab rows: [even..., odd...]; c = dy + ky
        return (c // 2) + (c % 2) * (tph + 1)

    def kernel(slab_ref, w_ref, b_ref, sum_ref, ssq_ref, ymax_ref, ymin_ref):
        # shared K-pad zeros block, built once per invocation (hoisted out of all loops)
        zpad = jnp.zeros((tph, pw, k_pad - k), jnp.bfloat16) if k_pad > k else None

        rows = []
        for img in range(ipg):
            xs = slab_ref[img]                       # (2*tph+2, 2*pw, 3*cin) bf16
            for dy in range(2):
                for dx in range(2):
                    taps = [xs[row_start(dy + ky):row_start(dy + ky) + tph,
                               dx * pw:(dx + 1) * pw, :]
                            for ky in range(3)]      # 3 contiguous bf16 slices (kx pre-folded)
                    if zpad is not None:
                        taps.append(zpad)
                    rows.append(jnp.concatenate(taps, axis=-1).reshape(m4, k_pad))
        lhs = jnp.concatenate(rows, axis=0)          # (ipg*4*m4, k_pad) bf16

        y = jnp.dot(lhs, w_ref[...], preferred_element_type=jnp.float32)   # MXU, f32 acc
        y = jnp.maximum(y + b_ref[...], 0.0)         # conv + bias + ReLU, (M, c_pad) f32

        # BatchNorm batch-stat partials for this step (reduced in the wrapper).
        sum_ref[...] = jnp.sum(y, axis=0, keepdims=True).reshape(sum_ref.shape)
        ssq_ref[...] = jnp.sum(y * y, axis=0, keepdims=True).reshape(ssq_ref.shape)

        # Per-2x2-window max/min of y (pool parities are contiguous m4-row blocks).
        for img in range(ipg):
            base = img * 4 * m4
            p0 = y[base + 0 * m4: base + 1 * m4]
            p1 = y[base + 1 * m4: base + 2 * m4]
            p2 = y[base + 2 * m4: base + 3 * m4]
            p3 = y[base + 3 * m4: base + 4 * m4]
            ymax_ref[img] = jnp.maximum(jnp.maximum(p0, p1),
                                        jnp.maximum(p2, p3)).astype(jnp.bfloat16)
            ymin_ref[img] = jnp.minimum(jnp.minimum(p0, p1),
                                        jnp.minimum(p2, p3)).astype(jnp.bfloat16)

    return kernel


def conv_block_forward(x_nchw, w_oihw, bias, gamma, beta):
    N, Cin, H, W = x_nchw.shape
    Cout = w_oihw.shape[0]
    assert H % 2 == 0 and W % 2 == 0
    PH, PW = H // 2, W // 2

    # ---- tiling: pooled-row tile (TPH) and images-per-step (IPG); M = IPG*4*TPH*PW ----
    TPH = 1
    for cand in range(1, PH + 1):
        if PH % cand == 0 and 4 * cand * PW <= M_BUDGET:
            TPH = cand
    NT = PH // TPH
    IPG = 1
    if NT == 1:                  # whole image per step -> pack multiple images per step
        for cand in range(1, N + 1):
            if N % cand == 0 and cand * 4 * PH * PW <= M_BUDGET:
                IPG = cand
    SLAB_H = 2 * TPH + 2
    M4 = TPH * PW
    K = 9 * Cin
    K_pad = _round_up(K, 128)
    C_pad = _round_up(Cout, 128)
    G = N * NT
    STEPS = G // IPG

    # ---- wrapper-side layout prep (all bf16): halo slabs with kx taps pre-folded ----
    x = jnp.transpose(x_nchw, (0, 2, 3, 1)).astype(jnp.bfloat16)       # NHWC bf16
    xp = jnp.pad(x, ((0, 0), (1, 1), (1, 1), (0, 0)))                  # (N, H+2, W+2, Cin)
    # pre-concatenate the 3 kx taps along channels -> (N, H+2, W, 3*Cin)
    x3 = jnp.concatenate([xp[:, :, 0:W, :], xp[:, :, 1:W + 1, :], xp[:, :, 2:W + 2, :]],
                         axis=-1)
    # de-interleave window-start columns by pool parity: [even..., odd...]
    col_perm = np.concatenate([np.arange(0, W, 2), np.arange(1, W, 2)])
    x3 = x3[:, :, col_perm, :]
    # gather per-tile row slabs, de-interleaved by pool parity: [even..., odd...]
    row_perm = np.concatenate([np.arange(0, SLAB_H, 2), np.arange(1, SLAB_H, 2)])
    row_idx = (2 * TPH) * np.arange(NT)[:, None] + row_perm[None, :]   # (NT, SLAB_H)
    slabs = x3[:, row_idx, :, :].reshape(G, SLAB_H, W, 3 * Cin)        # bf16

    # weights: (Cout,Cin,3,3) -> (ky,kx,Cin,Cout) -> (K,Cout), zero-pad to (K_pad,C_pad)
    wmat = jnp.transpose(w_oihw, (2, 3, 1, 0)).reshape(K, Cout).astype(jnp.float32)
    wmat = jnp.pad(wmat, ((0, K_pad - K), (0, C_pad - Cout))).astype(jnp.bfloat16)
    bvec = jnp.pad(bias.astype(jnp.float32), (0, C_pad - Cout)).reshape(1, C_pad)

    slab_kwargs = {}
    if STEPS >= 3:               # triple-buffer the only re-DMAed input on long grids
        slab_kwargs["pipeline_mode"] = pl.Buffered(3)
    slab_spec = pl.BlockSpec((IPG, SLAB_H, W, 3 * Cin), lambda i: (i, 0, 0, 0),
                             **slab_kwargs)
    w_spec = pl.BlockSpec((K_pad, C_pad), lambda i: (0, 0))
    b_spec = pl.BlockSpec((1, C_pad), lambda i: (0, 0))
    stat_spec = pl.BlockSpec((1, 1, C_pad), lambda i: (i, 0, 0))
    pool_spec = pl.BlockSpec((IPG, M4, C_pad), lambda i: (i, 0, 0))

    # ---- single fused pass: conv + ReLU -> {sum, sum^2} partials, window max/min ----
    sums, ssqs, ymax, ymin = pl.pallas_call(
        _make_conv_stats_pool_kernel(IPG, TPH, PW, K, K_pad, C_pad),
        out_shape=(jax.ShapeDtypeStruct((STEPS, 1, C_pad), jnp.float32),
                   jax.ShapeDtypeStruct((STEPS, 1, C_pad), jnp.float32),
                   jax.ShapeDtypeStruct((G, M4, C_pad), jnp.bfloat16),
                   jax.ShapeDtypeStruct((G, M4, C_pad), jnp.bfloat16)),
        grid_spec=pltpu.PrefetchScalarGridSpec(
            num_scalar_prefetch=0, grid=(STEPS,),
            in_specs=[slab_spec, w_spec, b_spec],
            out_specs=(stat_spec, stat_spec, pool_spec, pool_spec)),
        compiler_params=pltpu.CompilerParams(
            dimension_semantics=("parallel",),       # fully independent steps (v7x megacore)
            vmem_limit_bytes=VMEM_LIMIT),
    )(slabs, wmat, bvec)

    # ---- tiny XLA epilogue: BN batch stats + affine + exact 2x2 max-pool via max/min ----
    n_total = jnp.float32(N * H * W)
    mean = jnp.sum(sums, axis=0) / n_total                             # (1, C_pad)
    # NOTE: E[y^2]-mean^2 in f32 can cancel for very large activations; fine at these scales.
    var = jnp.maximum(jnp.sum(ssqs, axis=0) / n_total - mean * mean, 0.0)
    gamma_p = jnp.pad(gamma.astype(jnp.float32), (0, C_pad - Cout)).reshape(1, C_pad)
    beta_p = jnp.pad(beta.astype(jnp.float32), (0, C_pad - Cout)).reshape(1, C_pad)
    scale = (gamma_p * jax.lax.rsqrt(var + EPS)).reshape(1, 1, C_pad)
    shift = (beta_p - mean * gamma_p * jax.lax.rsqrt(var + EPS)).reshape(1, 1, C_pad)
    # max over a 2x2 window of (scale*y + shift) == max(scale*ymax, scale*ymin) + shift
    pooled = jnp.maximum(ymax.astype(jnp.float32) * scale + shift,
                         ymin.astype(jnp.float32) * scale + shift)     # (G, M4, C_pad)
    # TODO(synk): nn.Dropout(p>0) would use pltpu.prng_seed/prng_random_bits inside the kernel;
    # with the module default p = 0.0 it is the identity.
    out = pooled.reshape(N, PH, PW, C_pad)[..., :Cout]
    return jnp.transpose(out, (0, 3, 1, 2))


def _reference(x, w, b, gamma, beta):
    """Pure-JAX f32 reference matching a freshly-constructed (training-mode) ConvBlock."""
    y = jax.lax.conv_general_dilated(
        x, w, window_strides=(1, 1), padding=((1, 1), (1, 1)),
        dimension_numbers=("NCHW", "OIHW", "NCHW")) + b[None, :, None, None]
    y = jnp.maximum(y, 0.0)
    mean = jnp.mean(y, axis=(0, 2, 3), keepdims=True)
    var = jnp.mean((y - mean) ** 2, axis=(0, 2, 3), keepdims=True)
    y = (y - mean) * jax.lax.rsqrt(var + EPS)
    y = y * gamma[None, :, None, None] + beta[None, :, None, None]
    return jax.lax.reduce_window(y, -jnp.inf, jax.lax.max,
                                 (1, 1, 2, 2), (1, 1, 2, 2), "VALID")


if __name__ == "__main__":
    key = jax.random.PRNGKey(0)
    k1, k2, k3 = jax.random.split(key, 3)
    N, Cin, Cout, H, W = 2, 4, 8, 16, 16

    x = jax.random.normal(k1, (N, Cin, H, W), dtype=jnp.float32)
    conv_w = jax.random.normal(k2, (Cout, Cin, 3, 3), dtype=jnp.float32) * 0.1
    conv_b = jax.random.normal(k3, (Cout,), dtype=jnp.float32) * 0.1
    bn_gamma = jnp.ones((Cout,), dtype=jnp.float32)   # nn.BatchNorm2d default init
    bn_beta = jnp.zeros((Cout,), dtype=jnp.float32)

    out = jax.jit(conv_block_forward)(x, conv_w, conv_b, bn_gamma, bn_beta)
    out = jax.block_until_ready(out)

    ref = _reference(x, conv_w, conv_b, bn_gamma, bn_beta)
    # bf16 MXU operands + bf16 pooled max/min outputs -> loosened tolerance vs all-f32.
    np.testing.assert_allclose(np.asarray(out), np.asarray(ref), rtol=2e-2, atol=2e-2)
    print("KERNEL_OK")
</pallas_src>

<mosaic_0001>
module attributes {stable_mosaic.version = 11 : i64} {
  func.func @kernel(%arg0: i32, %arg1: memref<2x18x16x12xbf16, #tpu.memory_space<vmem>>, %arg2: memref<128x128xbf16, #tpu.memory_space<vmem>>, %arg3: memref<1x128xf32, #tpu.memory_space<vmem>>, %arg4: memref<1x1x128xf32, #tpu.memory_space<vmem>>, %arg5: memref<1x1x128xf32, #tpu.memory_space<vmem>>, %arg6: memref<2x64x128xbf16, #tpu.memory_space<vmem>>, %arg7: memref<2x64x128xbf16, #tpu.memory_space<vmem>>) attributes {dimension_semantics = [#tpu.dimension_semantics<parallel>], iteration_bounds = array<i64: 1>, scalar_prefetch = 0 : i64, scratch_operands = 0 : i64, tpu.core_type = #tpu.core_type<tc>, window_params = [{transform_indices = @transform_0, window_bounds = array<i64: 2, 18, 16, 12>}, {pipeline_mode = #tpu.pipeline_mode<synchronous>, transform_indices = @transform_1, window_bounds = array<i64: 128, 128>}, {pipeline_mode = #tpu.pipeline_mode<synchronous>, transform_indices = @transform_2, window_bounds = array<i64: 1, 128>}, {transform_indices = @transform_3, window_bounds = array<i64: 1, 1, 128>}, {transform_indices = @transform_4, window_bounds = array<i64: 1, 1, 128>}, {transform_indices = @transform_5, window_bounds = array<i64: 2, 64, 128>}, {transform_indices = @transform_6, window_bounds = array<i64: 2, 64, 128>}]} {
    %cst = arith.constant 0.000000e+00 : bf16
    %0 = vector.broadcast %cst : bf16 to vector<8x8x92xbf16>
    %c0 = arith.constant 0 : index
    %c0_0 = arith.constant 0 : index
    %c0_1 = arith.constant 0 : index
    %c0_2 = arith.constant 0 : index
    %1 = vector.load %arg1[%c0, %c0_0, %c0_1, %c0_2] : memref<2x18x16x12xbf16, #tpu.memory_space<vmem>>, vector<1x18x16x12xbf16>
    %2 = vector.shape_cast %1 : vector<1x18x16x12xbf16> to vector<18x16x12xbf16>
    %3 = vector.extract_strided_slice %2 {offsets = [0, 0, 0], sizes = [8, 8, 12], strides = [1, 1, 1]} : vector<18x16x12xbf16> to vector<8x8x12xbf16>
    %4 = vector.extract_strided_slice %2 {offsets = [9, 0, 0], sizes = [8, 8, 12], strides = [1, 1, 1]} : vector<18x16x12xbf16> to vector<8x8x12xbf16>
    %5 = vector.extract_strided_slice %2 {offsets = [1, 0, 0], sizes = [8, 8, 12], strides = [1, 1, 1]} : vector<18x16x12xbf16> to vector<8x8x12xbf16>
    %6 = tpu.concatenate %3, %4, %5, %0 in 2 : vector<8x8x12xbf16>, vector<8x8x12xbf16>, vector<8x8x12xbf16>, vector<8x8x92xbf16> -> vector<8x8x128xbf16>
    %7 = vector.shape_cast %6 : vector<8x8x128xbf16> to vector<64x128xbf16>
    %8 = vector.extract_strided_slice %2 {offsets = [0, 8, 0], sizes = [8, 8, 12], strides = [1, 1, 1]} : vector<18x16x12xbf16> to vector<8x8x12xbf16>
    %9 = vector.extract_strided_slice %2 {offsets = [9, 8, 0], sizes = [8, 8, 12], strides = [1, 1, 1]} : vector<18x16x12xbf16> to vector<8x8x12xbf16>
    %10 = vector.extract_strided_slice %2 {offsets = [1, 8, 0], sizes = [8, 8, 12], strides = [1, 1, 1]} : vector<18x16x12xbf16> to vector<8x8x12xbf16>
    %11 = tpu.concatenate %8, %9, %10, %0 in 2 : vector<8x8x12xbf16>, vector<8x8x12xbf16>, vector<8x8x12xbf16>, vector<8x8x92xbf16> -> vector<8x8x128xbf16>
    %12 = vector.shape_cast %11 : vector<8x8x128xbf16> to vector<64x128xbf16>
    %13 = vector.extract_strided_slice %2 {offsets = [9, 0, 0], sizes = [8, 8, 12], strides = [1, 1, 1]} : vector<18x16x12xbf16> to vector<8x8x12xbf16>
    %14 = vector.extract_strided_slice %2 {offsets = [1, 0, 0], sizes = [8, 8, 12], strides = [1, 1, 1]} : vector<18x16x12xbf16> to vector<8x8x12xbf16>
    %15 = vector.extract_strided_slice %2 {offsets = [10, 0, 0], sizes = [8, 8, 12], strides = [1, 1, 1]} : vector<18x16x12xbf16> to vector<8x8x12xbf16>
    %16 = tpu.concatenate %13, %14, %15, %0 in 2 : vector<8x8x12xbf16>, vector<8x8x12xbf16>, vector<8x8x12xbf16>, vector<8x8x92xbf16> -> vector<8x8x128xbf16>
    %17 = vector.shape_cast %16 : vector<8x8x128xbf16> to vector<64x128xbf16>
    %18 = vector.extract_strided_slice %2 {offsets = [9, 8, 0], sizes = [8, 8, 12], strides = [1, 1, 1]} : vector<18x16x12xbf16> to vector<8x8x12xbf16>
    %19 = vector.extract_strided_slice %2 {offsets = [1, 8, 0], sizes = [8, 8, 12], strides = [1, 1, 1]} : vector<18x16x12xbf16> to vector<8x8x12xbf16>
    %20 = vector.extract_strided_slice %2 {offsets = [10, 8, 0], sizes = [8, 8, 12], strides = [1, 1, 1]} : vector<18x16x12xbf16> to vector<8x8x12xbf16>
    %21 = tpu.concatenate %18, %19, %20, %0 in 2 : vector<8x8x12xbf16>, vector<8x8x12xbf16>, vector<8x8x12xbf16>, vector<8x8x92xbf16> -> vector<8x8x128xbf16>
    %22 = vector.shape_cast %21 : vector<8x8x128xbf16> to vector<64x128xbf16>
    %c1 = arith.constant 1 : index
    %c0_3 = arith.constant 0 : index
    %c0_4 = arith.constant 0 : index
    %c0_5 = arith.constant 0 : index
    %23 = vector.load %arg1[%c1, %c0_3, %c0_4, %c0_5] : memref<2x18x16x12xbf16, #tpu.memory_space<vmem>>, vector<1x18x16x12xbf16>
    %24 = vector.shape_cast %23 : vector<1x18x16x12xbf16> to vector<18x16x12xbf16>
    %25 = vector.extract_strided_slice %24 {offsets = [0, 0, 0], sizes = [8, 8, 12], strides = [1, 1, 1]} : vector<18x16x12xbf16> to vector<8x8x12xbf16>
    %26 = vector.extract_strided_slice %24 {offsets = [9, 0, 0], sizes = [8, 8, 12], strides = [1, 1, 1]} : vector<18x16x12xbf16> to vector<8x8x12xbf16>
    %27 = vector.extract_strided_slice %24 {offsets = [1, 0, 0], sizes = [8, 8, 12], strides = [1, 1, 1]} : vector<18x16x12xbf16> to vector<8x8x12xbf16>
    %28 = tpu.concatenate %25, %26, %27, %0 in 2 : vector<8x8x12xbf16>, vector<8x8x12xbf16>, vector<8x8x12xbf16>, vector<8x8x92xbf16> -> vector<8x8x128xbf16>
    %29 = vector.shape_cast %28 : vector<8x8x128xbf16> to vector<64x128xbf16>
    %30 = vector.extract_strided_slice %24 {offsets = [0, 8, 0], sizes = [8, 8, 12], strides = [1, 1, 1]} : vector<18x16x12xbf16> to vector<8x8x12xbf16>
    %31 = vector.extract_strided_slice %24 {offsets = [9, 8, 0], sizes = [8, 8, 12], strides = [1, 1, 1]} : vector<18x16x12xbf16> to vector<8x8x12xbf16>
    %32 = vector.extract_strided_slice %24 {offsets = [1, 8, 0], sizes = [8, 8, 12], strides = [1, 1, 1]} : vector<18x16x12xbf16> to vector<8x8x12xbf16>
    %33 = tpu.concatenate %30, %31, %32, %0 in 2 : vector<8x8x12xbf16>, vector<8x8x12xbf16>, vector<8x8x12xbf16>, vector<8x8x92xbf16> -> vector<8x8x128xbf16>
    %34 = vector.shape_cast %33 : vector<8x8x128xbf16> to vector<64x128xbf16>
    %35 = vector.extract_strided_slice %24 {offsets = [9, 0, 0], sizes = [8, 8, 12], strides = [1, 1, 1]} : vector<18x16x12xbf16> to vector<8x8x12xbf16>
    %36 = vector.extract_strided_slice %24 {offsets = [1, 0, 0], sizes = [8, 8, 12], strides = [1, 1, 1]} : vector<18x16x12xbf16> to vector<8x8x12xbf16>
    %37 = vector.extract_strided_slice %24 {offsets = [10, 0, 0], sizes = [8, 8, 12], strides = [1, 1, 1]} : vector<18x16x12xbf16> to vector<8x8x12xbf16>
    %38 = tpu.concatenate %35, %36, %37, %0 in 2 : vector<8x8x12xbf16>, vector<8x8x12xbf16>, vector<8x8x12xbf16>, vector<8x8x92xbf16> -> vector<8x8x128xbf16>
    %39 = vector.shape_cast %38 : vector<8x8x128xbf16> to vector<64x128xbf16>
    %40 = vector.extract_strided_slice %24 {offsets = [9, 8, 0], sizes = [8, 8, 12], strides = [1, 1, 1]} : vector<18x16x12xbf16> to vector<8x8x12xbf16>
    %41 = vector.extract_strided_slice %24 {offsets = [1, 8, 0], sizes = [8, 8, 12], strides = [1, 1, 1]} : vector<18x16x12xbf16> to vector<8x8x12xbf16>
    %42 = vector.extract_strided_slice %24 {offsets = [10, 8, 0], sizes = [8, 8, 12], strides = [1, 1, 1]} : vector<18x16x12xbf16> to vector<8x8x12xbf16>
    %43 = tpu.concatenate %40, %41, %42, %0 in 2 : vector<8x8x12xbf16>, vector<8x8x12xbf16>, vector<8x8x12xbf16>, vector<8x8x92xbf16> -> vector<8x8x128xbf16>
    %44 = vector.shape_cast %43 : vector<8x8x128xbf16> to vector<64x128xbf16>
    %45 = tpu.concatenate %7, %12, %17, %22, %29, %34, %39, %44 in 0 : vector<64x128xbf16>, vector<64x128xbf16>, vector<64x128xbf16>, vector<64x128xbf16>, vector<64x128xbf16>, vector<64x128xbf16>, vector<64x128xbf16>, vector<64x128xbf16> -> vector<512x128xbf16>
    %c0_6 = arith.constant 0 : index
    %c0_7 = arith.constant 0 : index
    %46 = vector.load %arg2[%c0_6, %c0_7] : memref<128x128xbf16, #tpu.memory_space<vmem>>, vector<128x128xbf16>
    %cst_8 = arith.constant dense<0.000000e+00> : vector<512x128xf32>
    %47 = tpu.matmul %45, %46, %cst_8 {dimension_numbers = #tpu.dot_dimension_numbers<[1], [0], [0], [1], [0, 0, 1, 1], [], []>} : vector<512x128xbf16>, vector<128x128xbf16>, vector<512x128xf32> -> vector<512x128xf32>
    %c0_9 = arith.constant 0 : index
    %c0_10 = arith.constant 0 : index
    %48 = vector.load %arg3[%c0_9, %c0_10] : memref<1x128xf32, #tpu.memory_space<vmem>>, vector<1x128xf32>
    %49 = vector.broadcast %48 : vector<1x128xf32> to vector<512x128xf32>
    %50 = arith.addf %47, %49 : vector<512x128xf32>
    %cst_11 = arith.constant 0.000000e+00 : f32
    %51 = vector.broadcast %cst_11 : f32 to vector<512x128xf32>
    %52 = arith.maximumf %50, %51 : vector<512x128xf32>
    %cst_12 = arith.constant dense<0.000000e+00> : vector<128xf32>
    %53 = vector.multi_reduction <add>, %52, %cst_12 [0] : vector<512x128xf32> to vector<128xf32>
    %54 = vector.shape_cast %53 : vector<128xf32> to vector<1x128xf32>
    %55 = vector.shape_cast %54 : vector<1x128xf32> to vector<1x1x128xf32>
    %c0_13 = arith.constant 0 : index
    %c0_14 = arith.constant 0 : index
    %c0_15 = arith.constant 0 : index
    %56 = vector.load %arg4[%c0_13, %c0_14, %c0_15] : memref<1x1x128xf32, #tpu.memory_space<vmem>>, vector<1x1x128xf32>
    tpu.vector_store %arg4[%c0_13, %c0_14, %c0_15], %55 {strides = array<i32>} : memref<1x1x128xf32, #tpu.memory_space<vmem>>, vector<1x1x128xf32>,
    %57 = arith.mulf %52, %52 : vector<512x128xf32>
    %cst_16 = arith.constant dense<0.000000e+00> : vector<128xf32>
    %58 = vector.multi_reduction <add>, %57, %cst_16 [0] : vector<512x128xf32> to vector<128xf32>
    %59 = vector.shape_cast %58 : vector<128xf32> to vector<1x128xf32>
    %60 = vector.shape_cast %59 : vector<1x128xf32> to vector<1x1x128xf32>
    %c0_17 = arith.constant 0 : index
    %c0_18 = arith.constant 0 : index
    %c0_19 = arith.constant 0 : index
    %61 = vector.load %arg5[%c0_17, %c0_18, %c0_19] : memref<1x1x128xf32, #tpu.memory_space<vmem>>, vector<1x1x128xf32>
    tpu.vector_store %arg5[%c0_17, %c0_18, %c0_19], %60 {strides = array<i32>} : memref<1x1x128xf32, #tpu.memory_space<vmem>>, vector<1x1x128xf32>,
    %62 = vector.extract_strided_slice %52 {offsets = [0, 0], sizes = [64, 128], strides = [1, 1]} : vector<512x128xf32> to vector<64x128xf32>
    %63 = vector.extract_strided_slice %52 {offsets = [64, 0], sizes = [64, 128], strides = [1, 1]} : vector<512x128xf32> to vector<64x128xf32>
    %64 = vector.extract_strided_slice %52 {offsets = [128, 0], sizes = [64, 128], strides = [1, 1]} : vector<512x128xf32> to vector<64x128xf32>
    %65 = vector.extract_strided_slice %52 {offsets = [192, 0], sizes = [64, 128], strides = [1, 1]} : vector<512x128xf32> to vector<64x128xf32>
    %66 = arith.maximumf %62, %63 : vector<64x128xf32>
    %67 = arith.maximumf %64, %65 : vector<64x128xf32>
    %68 = arith.maximumf %66, %67 : vector<64x128xf32>
    %69 = arith.truncf %68 : vector<64x128xf32> to vector<64x128xbf16>
    %c0_20 = arith.constant 0 : index
    %c0_21 = arith.constant 0 : index
    %c0_22 = arith.constant 0 : index
    %70 = vector.load %arg6[%c0_20, %c0_21, %c0_22] : memref<2x64x128xbf16, #tpu.memory_space<vmem>>, vector<1x64x128xbf16>
    %71 = vector.shape_cast %70 : vector<1x64x128xbf16> to vector<64x128xbf16>
    %72 = vector.shape_cast %69 : vector<64x128xbf16> to vector<1x64x128xbf16>
    tpu.vector_store %arg6[%c0_20, %c0_21, %c0_22], %72 {strides = array<i32>} : memref<2x64x128xbf16, #tpu.memory_space<vmem>>, vector<1x64x128xbf16>,
    %73 = arith.minimumf %62, %63 : vector<64x128xf32>
    %74 = arith.minimumf %64, %65 : vector<64x128xf32>
    %75 = arith.minimumf %73, %74 : vector<64x128xf32>
    %76 = arith.truncf %75 : vector<64x128xf32> to vector<64x128xbf16>
    %c0_23 = arith.constant 0 : index
    %c0_24 = arith.constant 0 : index
    %c0_25 = arith.constant 0 : index
    %77 = vector.load %arg7[%c0_23, %c0_24, %c0_25] : memref<2x64x128xbf16, #tpu.memory_space<vmem>>, vector<1x64x128xbf16>
    %78 = vector.shape_cast %77 : vector<1x64x128xbf16> to vector<64x128xbf16>
    %79 = vector.shape_cast %76 : vector<64x128xbf16> to vector<1x64x128xbf16>
    tpu.vector_store %arg7[%c0_23, %c0_24, %c0_25], %79 {strides = array<i32>} : memref<2x64x128xbf16, #tpu.memory_space<vmem>>, vector<1x64x128xbf16>,
    %80 = vector.extract_strided_slice %52 {offsets = [256, 0], sizes = [64, 128], strides = [1, 1]} : vector<512x128xf32> to vector<64x128xf32>
    %81 = vector.extract_strided_slice %52 {offsets = [320, 0], sizes = [64, 128], strides = [1, 1]} : vector<512x128xf32> to vector<64x128xf32>
    %82 = vector.extract_strided_slice %52 {offsets = [384, 0], sizes = [64, 128], strides = [1, 1]} : vector<512x128xf32> to vector<64x128xf32>
    %83 = vector.extract_strided_slice %52 {offsets = [448, 0], sizes = [64, 128], strides = [1, 1]} : vector<512x128xf32> to vector<64x128xf32>
    %84 = arith.maximumf %80, %81 : vector<64x128xf32>
    %85 = arith.maximumf %82, %83 : vector<64x128xf32>
    %86 = arith.maximumf %84, %85 : vector<64x128xf32>
    %87 = arith.truncf %86 : vector<64x128xf32> to vector<64x128xbf16>
    %c1_26 = arith.constant 1 : index
    %c0_27 = arith.constant 0 : index
    %c0_28 = arith.constant 0 : index
    %88 = vector.load %arg6[%c1_26, %c0_27, %c0_28] : memref<2x64x128xbf16, #tpu.memory_space<vmem>>, vector<1x64x128xbf16>
    %89 = vector.shape_cast %88 : vector<1x64x128xbf16> to vector<64x128xbf16>
    %90 = vector.shape_cast %87 : vector<64x128xbf16> to vector<1x64x128xbf16>
    tpu.vector_store %arg6[%c1_26, %c0_27, %c0_28], %90 {strides = array<i32>} : memref<2x64x128xbf16, #tpu.memory_space<vmem>>, vector<1x64x128xbf16>,
    %91 = arith.minimumf %80, %81 : vector<64x128xf32>
    %92 = arith.minimumf %82, %83 : vector<64x128xf32>
    %93 = arith.minimumf %91, %92 : vector<64x128xf32>
    %94 = arith.truncf %93 : vector<64x128xf32> to vector<64x128xbf16>
    %c1_29 = arith.constant 1 : index
    %c0_30 = arith.constant 0 : index
    %c0_31 = arith.constant 0 : index
    %95 = vector.load %arg7[%c1_29, %c0_30, %c0_31] : memref<2x64x128xbf16, #tpu.memory_space<vmem>>, vector<1x64x128xbf16>
    %96 = vector.shape_cast %95 : vector<1x64x128xbf16> to vector<64x128xbf16>
    %97 = vector.shape_cast %94 : vector<64x128xbf16> to vector<1x64x128xbf16>
    tpu.vector_store %arg7[%c1_29, %c0_30, %c0_31], %97 {strides = array<i32>} : memref<2x64x128xbf16, #tpu.memory_space<vmem>>, vector<1x64x128xbf16>,
    return
  }
  func.func @transform_0(%arg0: i32) -> (i32, i32, i32, i32) {
    %c0_i32 = arith.constant 0 : i32
    %c0_i32_0 = arith.constant 0 : i32
    %c0_i32_1 = arith.constant 0 : i32
    %c0_i32_2 = arith.constant 0 : i32
    return %arg0, %c0_i32, %c0_i32_0, %c0_i32_1 : i32, i32, i32, i32
  }
  func.func @transform_1(%arg0: i32) -> (i32, i32) {
    %c0_i32 = arith.constant 0 : i32
    %c0_i32_0 = arith.constant 0 : i32
    %c0_i32_1 = arith.constant 0 : i32
    return %c0_i32, %c0_i32_0 : i32, i32
  }
  func.func @transform_2(%arg0: i32) -> (i32, i32) {
    %c0_i32 = arith.constant 0 : i32
    %c0_i32_0 = arith.constant 0 : i32
    %c0_i32_1 = arith.constant 0 : i32
    return %c0_i32, %c0_i32_0 : i32, i32
  }
  func.func @transform_3(%arg0: i32) -> (i32, i32, i32) {
    %c0_i32 = arith.constant 0 : i32
    %c0_i32_0 = arith.constant 0 : i32
    %c0_i32_1 = arith.constant 0 : i32
    return %arg0, %c0_i32, %c0_i32_0 : i32, i32, i32
  }
  func.func @transform_4(%arg0: i32) -> (i32, i32, i32) {
    %c0_i32 = arith.constant 0 : i32
    %c0_i32_0 = arith.constant 0 : i32
    %c0_i32_1 = arith.constant 0 : i32
    return %arg0, %c0_i32, %c0_i32_0 : i32, i32, i32
  }
  func.func @transform_5(%arg0: i32) -> (i32, i32, i32) {
    %c0_i32 = arith.constant 0 : i32
    %c0_i32_0 = arith.constant 0 : i32
    %c0_i32_1 = arith.constant 0 : i32
    return %arg0, %c0_i32, %c0_i32_0 : i32, i32, i32
  }
  func.func @transform_6(%arg0: i32) -> (i32, i32, i32) {
    %c0_i32 = arith.constant 0 : i32
    %c0_i32_0 = arith.constant 0 : i32
    %c0_i32_1 = arith.constant 0 : i32
    return %arg0, %c0_i32, %c0_i32_0 : i32, i32, i32
  }
}

</mosaic_0001>

<llo_original>
// kernel: conv_block_forward.1
$region0: #{conv_block_forward.1}
  #allocation0 [shape = 'u32[]', space=smem, size = 0x4, offset = 0x4, fixed_abs, tag = 'smem constant byte address 0x4 - core index']
  #allocation1 [shape = 'u32[144,128]{1,0:T(1,128)}', space=vmem, size = 0x12000, scoped, tag = 'internal scratch']
  %s0 = inlined_call_operand.vmem [shape: bf16[2,18,16,12], index: 0, kind: input, shape index: {}]
  %s1 = inlined_call_operand.vmem [shape: bf16[128,128], index: 1, kind: input, shape index: {}]
  %s2 = inlined_call_operand.vmem [shape: f32[1,128], index: 2, kind: input, shape index: {}]
  %s3 = inlined_call_operand.vmem [shape: f32[1,1,128], index: 3, kind: output, shape index: {0}]
  %s4 = inlined_call_operand.vmem [shape: f32[1,1,128], index: 4, kind: output, shape index: {1}]
  %s5 = inlined_call_operand.vmem [shape: bf16[2,64,128], index: 5, kind: output, shape index: {2}]
  %s6 = inlined_call_operand.vmem [shape: bf16[2,64,128], index: 6, kind: output, shape index: {3}]
  %7 = xla_tuple %s3, %s4, %s5, %s6
  %s8 = sld [smem:[#allocation0]]
  $region46: #{conv_block_forward.1} parent=0
    _
  %s10 = ssub.s32 1, %s8
  %s11 = scalar_select 0, %s10, %s8
  // Predicated region
  $region2: #{conv_block_forward.1} parent=0 // pred_check
    _
  $region3: #{conv_block_forward.1} parent=0 // pred_check_branch
    %13 = sbr.rel (0) target = $region5
  $region4: #{conv_block_forward.1} parent=0 // pred_region
    _
  $region5: #{conv_block_forward.1} parent=0 // pred_fallthru
    _
  // Predicated region
  $region6: #{conv_block_forward.1} parent=0 // pred_check
    _
  $region7: #{conv_block_forward.1} parent=0 // pred_check_branch
    %15 = sbr.rel (0) target = $region9
  $region8: #{conv_block_forward.1} parent=0 // pred_region
    _
  $region9: #{conv_block_forward.1} parent=0 // pred_fallthru
    _
  // Predicated region
  $region10: #{conv_block_forward.1} parent=0 // pred_check
    _
  $region11: #{conv_block_forward.1} parent=0 // pred_check_branch
    %17 = sbr.rel (0) target = $region13
  $region12: #{conv_block_forward.1} parent=0 // pred_region
    _
  $region13: #{conv_block_forward.1} parent=0 // pred_fallthru
    _
  %v19 = vld [vmem:[%s0] sm:$0xf]
  %v20 = vld [vmem:[%s0 + $0x4] sm:$0xf]
  %v21 = vld [vmem:[%s0 + $0x8] sm:$0xf]
  %v22 = vld [vmem:[%s0 + $0xc] sm:$0xf]
  %v23 = vld [vmem:[%s0 + $0x10] sm:$0xf]
  %v24 = vld [vmem:[%s0 + $0x14] sm:$0xf]
  %v25 = vld [vmem:[%s0 + $0x18] sm:$0xf]
  %v26 = vld [vmem:[%s0 + $0x1c] sm:$0xf]
  %v27 = vld [vmem:[%s0 + $0x20] sm:$0xf]
  %v28 = vld [vmem:[%s0 + $0x24] sm:$0xf]
  %v29 = vld [vmem:[%s0 + $0x28] sm:$0xf]
  %v30 = vld [vmem:[%s0 + $0x2c] sm:$0xf]
  %v31 = vld [vmem:[%s0 + $0x30] sm:$0xf]
  %v32 = vld [vmem:[%s0 + $0x34] sm:$0xf]
  %v33 = vld [vmem:[%s0 + $0x38] sm:$0xf]
  %v34 = vld [vmem:[%s0 + $0x3c] sm:$0xf]
  %v35 = vld [vmem:[%s0 + $0x40] sm:$0xf]
  %v36 = vld [vmem:[%s0 + $0x44] sm:$0xf]
  %v37 = vld [vmem:[%s0 + $0x48] sm:$0xf]
  %v38 = vld [vmem:[%s0 + $0x4c] sm:$0xf]
  %v39 = vld [vmem:[%s0 + $0x50] sm:$0xf]
  %v40 = vld [vmem:[%s0 + $0x54] sm:$0xf]
  %v41 = vld [vmem:[%s0 + $0x58] sm:$0xf]
  %v42 = vld [vmem:[%s0 + $0x5c] sm:$0xf]
  %v43 = vld [vmem:[%s0 + $0x60] sm:$0xf]
  %v44 = vld [vmem:[%s0 + $0x64] sm:$0xf]
  %v45 = vld [vmem:[%s0 + $0x68] sm:$0xf]
  %v46 = vld [vmem:[%s0 + $0x6c] sm:$0xf]
  %v47 = vld [vmem:[%s0 + $0x70] sm:$0xf]
  %v48 = vld [vmem:[%s0 + $0x74] sm:$0xf]
  %v49 = vld [vmem:[%s0 + $0x78] sm:$0xf]
  %v50 = vld [vmem:[%s0 + $0x7c] sm:$0xf]
  %v51 = vld [vmem:[%s0 + $0x80] sm:$0xf]
  %v52 = vld [vmem:[%s0 + $0x84] sm:$0xf]
  %v53 = vld [vmem:[%s0 + $0x88] sm:$0xf]
  %v54 = vld [vmem:[%s0 + $0x8c] sm:$0xf]
  %v63 = vunpack.c.l.b16 %v37
  %v64 = vunpack.c.l.b16 %v39
  %v65 = vunpack.c.l.b16 %v41
  %v66 = vunpack.c.l.b16 %v43
  %v67 = vunpack.c.l.b16 %v45
  %v68 = vunpack.c.l.b16 %v47
  %v69 = vunpack.c.l.b16 %v49
  %v70 = vunpack.c.l.b16 %v51
  %v71 = vpack.c.b16 %v63, %v63
  %v72 = vpack.c.b16 %v64, %v64
  %v73 = vpack.c.b16 %v65, %v65
  %v74 = vpack.c.b16 %v66, %v66
  %v75 = vpack.c.b16 %v67, %v67
  %v76 = vpack.c.b16 %v68, %v68
  %v77 = vpack.c.b16 %v69, %v69
  %v78 = vpack.c.b16 %v70, %v70
  %79 = vrot.lane.b32.xlu0 %v71, 12
  %v80 = vpop.permute.xlu0 %79
  %81 = vrot.lane.b32.xlu0 %v72, 12
  %v82 = vpop.permute.xlu0 %81
  %83 = vrot.lane.b32.xlu0 %v73, 12
  %v84 = vpop.permute.xlu0 %83
  %85 = vrot.lane.b32.xlu0 %v74, 12
  %v86 = vpop.permute.xlu0 %85
  %87 = vrot.lane.b32.xlu0 %v75, 12
  %v88 = vpop.permute.xlu0 %87
  %89 = vrot.lane.b32.xlu0 %v76, 12
  %v90 = vpop.permute.xlu0 %89
  %91 = vrot.lane.b32.xlu0 %v77, 12
  %v92 = vpop.permute.xlu0 %91
  %93 = vrot.lane.b32.xlu0 %v78, 12
  %v94 = vpop.permute.xlu0 %93
  %v103 = vunpack.c.l.b16 %v21
  %v104 = vunpack.c.l.b16 %v23
  %v105 = vunpack.c.l.b16 %v25
  %v106 = vunpack.c.l.b16 %v27
  %v107 = vunpack.c.l.b16 %v29
  %v108 = vunpack.c.l.b16 %v31
  %v109 = vunpack.c.l.b16 %v33
  %v110 = vunpack.c.l.b16 %v35
  %v111 = vpack.c.b16 %v103, %v103
  %v112 = vpack.c.b16 %v104, %v104
  %v113 = vpack.c.b16 %v105, %v105
  %v114 = vpack.c.b16 %v106, %v106
  %v115 = vpack.c.b16 %v107, %v107
  %v116 = vpack.c.b16 %v108, %v108
  %v117 = vpack.c.b16 %v109, %v109
  %v118 = vpack.c.b16 %v110, %v110
  %119 = vrot.lane.b32.xlu0 %v111, 24
  %v120 = vpop.permute.xlu0 %119
  %121 = vrot.lane.b32.xlu0 %v112, 24
  %v122 = vpop.permute.xlu0 %121
  %123 = vrot.lane.b32.xlu0 %v113, 24
  %v124 = vpop.permute.xlu0 %123
  %125 = vrot.lane.b32.xlu0 %v114, 24
  %v126 = vpop.permute.xlu0 %125
  %127 = vrot.lane.b32.xlu0 %v115, 24
  %v128 = vpop.permute.xlu0 %127
  %129 = vrot.lane.b32.xlu0 %v116, 24
  %v130 = vpop.permute.xlu0 %129
  %131 = vrot.lane.b32.xlu0 %v117, 24
  %v132 = vpop.permute.xlu0 %131
  %133 = vrot.lane.b32.xlu0 %v118, 24
  %v134 = vpop.permute.xlu0 %133
  %vm135 = vcmask 97280
  %v138 = vsel %vm135, %v19, %v80
  %v141 = vsel %vm135, %v21, %v82
  %v144 = vsel %vm135, %v23, %v84
  %v147 = vsel %vm135, %v25, %v86
  %v150 = vsel %vm135, %v27, %v88
  %v153 = vsel %vm135, %v29, %v90
  %v156 = vsel %vm135, %v31, %v92
  %v159 = vsel %vm135, %v33, %v94
  %vm160 = vcmask 195584
  %v162 = vsel %vm160, %v138, %v120
  %v164 = vsel %vm160, %v141, %v122
  %v166 = vsel %vm160, %v144, %v124
  %v168 = vsel %vm160, %v147, %v126
  %v170 = vsel %vm160, %v150, %v128
  %v172 = vsel %vm160, %v153, %v130
  %v174 = vsel %vm160, %v156, %v132
  %v176 = vsel %vm160, %v159, %v134
  %vm177 = vcmask 293888
  %v179 = vsel %vm177, %v162, 0
  %v180 = vsel %vm177, %v164, 0
  %v181 = vsel %vm177, %v166, 0
  %v182 = vsel %vm177, %v168, 0
  %v183 = vsel %vm177, %v170, 0
  %v184 = vsel %vm177, %v172, 0
  %v185 = vsel %vm177, %v174, 0
  %v186 = vsel %vm177, %v176, 0
  %v195 = vunpack.c.l.b16 %v38
  %v196 = vunpack.c.l.b16 %v40
  %v197 = vunpack.c.l.b16 %v42
  %v198 = vunpack.c.l.b16 %v44
  %v199 = vunpack.c.l.b16 %v46
  %v200 = vunpack.c.l.b16 %v48
  %v201 = vunpack.c.l.b16 %v50
  %v202 = vunpack.c.l.b16 %v52
  %v203 = vpack.c.b16 %v195, %v195
  %v204 = vpack.c.b16 %v196, %v196
  %v205 = vpack.c.b16 %v197, %v197
  %v206 = vpack.c.b16 %v198, %v198
  %v207 = vpack.c.b16 %v199, %v199
  %v208 = vpack.c.b16 %v200, %v200
  %v209 = vpack.c.b16 %v201, %v201
  %v210 = vpack.c.b16 %v202, %v202
  %211 = vrot.lane.b32.xlu0 %v203, 12
  %v212 = vpop.permute.xlu0 %211
  %213 = vrot.lane.b32.xlu0 %v204, 12
  %v214 = vpop.permute.xlu0 %213
  %215 = vrot.lane.b32.xlu0 %v205, 12
  %v216 = vpop.permute.xlu0 %215
  %217 = vrot.lane.b32.xlu0 %v206, 12
  %v218 = vpop.permute.xlu0 %217
  %219 = vrot.lane.b32.xlu0 %v207, 12
  %v220 = vpop.permute.xlu0 %219
  %221 = vrot.lane.b32.xlu0 %v208, 12
  %v222 = vpop.permute.xlu0 %221
  %223 = vrot.lane.b32.xlu0 %v209, 12
  %v224 = vpop.permute.xlu0 %223
  %225 = vrot.lane.b32.xlu0 %v210, 12
  %v226 = vpop.permute.xlu0 %225
  %v235 = vunpack.c.l.b16 %v22
  %v236 = vunpack.c.l.b16 %v24
  %v237 = vunpack.c.l.b16 %v26
  %v238 = vunpack.c.l.b16 %v28
  %v239 = vunpack.c.l.b16 %v30
  %v240 = vunpack.c.l.b16 %v32
  %v241 = vunpack.c.l.b16 %v34
  %v242 = vunpack.c.l.b16 %v36
  %v243 = vpack.c.b16 %v235, %v235
  %v244 = vpack.c.b16 %v236, %v236
  %v245 = vpack.c.b16 %v237, %v237
  %v246 = vpack.c.b16 %v238, %v238
  %v247 = vpack.c.b16 %v239, %v239
  %v248 = vpack.c.b16 %v240, %v240
  %v249 = vpack.c.b16 %v241, %v241
  %v250 = vpack.c.b16 %v242, %v242
  %251 = vrot.lane.b32.xlu0 %v243, 24
  %v252 = vpop.permute.xlu0 %251
  %253 = vrot.lane.b32.xlu0 %v244, 24
  %v254 = vpop.permute.xlu0 %253
  %255 = vrot.lane.b32.xlu0 %v245, 24
  %v256 = vpop.permute.xlu0 %255
  %257 = vrot.lane.b32.xlu0 %v246, 24
  %v258 = vpop.permute.xlu0 %257
  %259 = vrot.lane.b32.xlu0 %v247, 24
  %v260 = vpop.permute.xlu0 %259
  %261 = vrot.lane.b32.xlu0 %v248, 24
  %v262 = vpop.permute.xlu0 %261
  %263 = vrot.lane.b32.xlu0 %v249, 24
  %v264 = vpop.permute.xlu0 %263
  %265 = vrot.lane.b32.xlu0 %v250, 24
  %v266 = vpop.permute.xlu0 %265
  %v269 = vsel %vm135, %v20, %v212
  %v272 = vsel %vm135, %v22, %v214
  %v275 = vsel %vm135, %v24, %v216
  %v278 = vsel %vm135, %v26, %v218
  %v281 = vsel %vm135, %v28, %v220
  %v284 = vsel %vm135, %v30, %v222
  %v287 = vsel %vm135, %v32, %v224
  %v290 = vsel %vm135, %v34, %v226
  %v292 = vsel %vm160, %v269, %v252
  %v294 = vsel %vm160, %v272, %v254
  %v296 = vsel %vm160, %v275, %v256
  %v298 = vsel %vm160, %v278, %v258
  %v300 = vsel %vm160, %v281, %v260
  %v302 = vsel %vm160, %v284, %v262
  %v304 = vsel %vm160, %v287, %v264
  %v306 = vsel %vm160, %v290, %v266
  %v307 = vsel %vm177, %v292, 0
  %v308 = vsel %vm177, %v294, 0
  %v309 = vsel %vm177, %v296, 0
  %v310 = vsel %vm177, %v298, 0
  %v311 = vsel %vm177, %v300, 0
  %v312 = vsel %vm177, %v302, 0
  %v313 = vsel %vm177, %v304, 0
  %v314 = vsel %vm177, %v306, 0
  %315 = vrot.lane.b32.xlu0 %v111, 12
  %v316 = vpop.permute.xlu0 %315
  %317 = vrot.lane.b32.xlu0 %v112, 12
  %v318 = vpop.permute.xlu0 %317
  %319 = vrot.lane.b32.xlu0 %v113, 12
  %v320 = vpop.permute.xlu0 %319
  %321 = vrot.lane.b32.xlu0 %v114, 12
  %v322 = vpop.permute.xlu0 %321
  %323 = vrot.lane.b32.xlu0 %v115, 12
  %v324 = vpop.permute.xlu0 %323
  %325 = vrot.lane.b32.xlu0 %v116, 12
  %v326 = vpop.permute.xlu0 %325
  %327 = vrot.lane.b32.xlu0 %v117, 12
  %v328 = vpop.permute.xlu0 %327
  %329 = vrot.lane.b32.xlu0 %v118, 12
  %v330 = vpop.permute.xlu0 %329
  %v332 = vunpack.c.l.b16 %v53
  %v333 = vpack.c.b16 %v332, %v332
  %334 = vrot.lane.b32.xlu0 %v72, 24
  %v335 = vpop.permute.xlu0 %334
  %336 = vrot.lane.b32.xlu0 %v73, 24
  %v337 = vpop.permute.xlu0 %336
  %338 = vrot.lane.b32.xlu0 %v74, 24
  %v339 = vpop.permute.xlu0 %338
  %340 = vrot.lane.b32.xlu0 %v75, 24
  %v341 = vpop.permute.xlu0 %340
  %342 = vrot.lane.b32.xlu0 %v76, 24
  %v343 = vpop.permute.xlu0 %342
  %344 = vrot.lane.b32.xlu0 %v77, 24
  %v345 = vpop.permute.xlu0 %344
  %346 = vrot.lane.b32.xlu0 %v78, 24
  %v347 = vpop.permute.xlu0 %346
  %348 = vrot.lane.b32.xlu0 %v333, 24
  %v349 = vpop.permute.xlu0 %348
  %v352 = vsel %vm135, %v37, %v316
  %v355 = vsel %vm135, %v39, %v318
  %v358 = vsel %vm135, %v41, %v320
  %v361 = vsel %vm135, %v43, %v322
  %v364 = vsel %vm135, %v45, %v324
  %v367 = vsel %vm135, %v47, %v326
  %v370 = vsel %vm135, %v49, %v328
  %v373 = vsel %vm135, %v51, %v330
  %v375 = vsel %vm160, %v352, %v335
  %v377 = vsel %vm160, %v355, %v337
  %v379 = vsel %vm160, %v358, %v339
  %v381 = vsel %vm160, %v361, %v341
  %v383 = vsel %vm160, %v364, %v343
  %v385 = vsel %vm160, %v367, %v345
  %v387 = vsel %vm160, %v370, %v347
  %v389 = vsel %vm160, %v373, %v349
  %v390 = vsel %vm177, %v375, 0
  %v391 = vsel %vm177, %v377, 0
  %v392 = vsel %vm177, %v379, 0
  %v393 = vsel %vm177, %v381, 0
  %v394 = vsel %vm177, %v383, 0
  %v395 = vsel %vm177, %v385, 0
  %v396 = vsel %vm177, %v387, 0
  %v397 = vsel %vm177, %v389, 0
  %398 = vrot.lane.b32.xlu0 %v243, 12
  %v399 = vpop.permute.xlu0 %398
  %400 = vrot.lane.b32.xlu0 %v244, 12
  %v401 = vpop.permute.xlu0 %400
  %402 = vrot.lane.b32.xlu0 %v245, 12
  %v403 = vpop.permute.xlu0 %402
  %404 = vrot.lane.b32.xlu0 %v246, 12
  %v405 = vpop.permute.xlu0 %404
  %406 = vrot.lane.b32.xlu0 %v247, 12
  %v407 = vpop.permute.xlu0 %406
  %408 = vrot.lane.b32.xlu0 %v248, 12
  %v409 = vpop.permute.xlu0 %408
  %410 = vrot.lane.b32.xlu0 %v249, 12
  %v411 = vpop.permute.xlu0 %410
  %412 = vrot.lane.b32.xlu0 %v250, 12
  %v413 = vpop.permute.xlu0 %412
  %v415 = vunpack.c.l.b16 %v54
  %v416 = vpack.c.b16 %v415, %v415
  %417 = vrot.lane.b32.xlu0 %v204, 24
  %v418 = vpop.permute.xlu0 %417
  %419 = vrot.lane.b32.xlu0 %v205, 24
  %v420 = vpop.permute.xlu0 %419
  %421 = vrot.lane.b32.xlu0 %v206, 24
  %v422 = vpop.permute.xlu0 %421
  %423 = vrot.lane.b32.xlu0 %v207, 24
  %v424 = vpop.permute.xlu0 %423
  %425 = vrot.lane.b32.xlu0 %v208, 24
  %v426 = vpop.permute.xlu0 %425
  %427 = vrot.lane.b32.xlu0 %v209, 24
  %v428 = vpop.permute.xlu0 %427
  %429 = vrot.lane.b32.xlu0 %v210, 24
  %v430 = vpop.permute.xlu0 %429
  %431 = vrot.lane.b32.xlu0 %v416, 24
  %v432 = vpop.permute.xlu0 %431
  %v435 = vsel %vm135, %v38, %v399
  %v438 = vsel %vm135, %v40, %v401
  %v441 = vsel %vm135, %v42, %v403
  %v444 = vsel %vm135, %v44, %v405
  %v447 = vsel %vm135, %v46, %v407
  %v450 = vsel %vm135, %v48, %v409
  %v453 = vsel %vm135, %v50, %v411
  %v456 = vsel %vm135, %v52, %v413
  %v458 = vsel %vm160, %v435, %v418
  %v460 = vsel %vm160, %v438, %v420
  %v462 = vsel %vm160, %v441, %v422
  %v464 = vsel %vm160, %v444, %v424
  %v466 = vsel %vm160, %v447, %v426
  %v468 = vsel %vm160, %v450, %v428
  %v470 = vsel %vm160, %v453, %v430
  %v472 = vsel %vm160, %v456, %v432
  %v473 = vsel %vm177, %v458, 0
  %v474 = vsel %vm177, %v460, 0
  %v475 = vsel %vm177, %v462, 0
  %v476 = vsel %vm177, %v464, 0
  %v477 = vsel %vm177, %v466, 0
  %v478 = vsel %vm177, %v468, 0
  %v479 = vsel %vm177, %v470, 0
  %v480 = vsel %vm177, %v472, 0
  %s481 = scalar_lea.vmem %s0, 144
  %v482 = vld [vmem:[%s481] sm:$0xf]
  %v483 = vld [vmem:[%s481 + $0x4] sm:$0xf]
  %v484 = vld [vmem:[%s481 + $0x8] sm:$0xf]
  %v485 = vld [vmem:[%s481 + $0xc] sm:$0xf]
  %v486 = vld [vmem:[%s481 + $0x10] sm:$0xf]
  %v487 = vld [vmem:[%s481 + $0x14] sm:$0xf]
  %v488 = vld [vmem:[%s481 + $0x18] sm:$0xf]
  %v489 = vld [vmem:[%s481 + $0x1c] sm:$0xf]
  %v490 = vld [vmem:[%s481 + $0x20] sm:$0xf]
  %v491 = vld [vmem:[%s481 + $0x24] sm:$0xf]
  %v492 = vld [vmem:[%s481 + $0x28] sm:$0xf]
  %v493 = vld [vmem:[%s481 + $0x2c] sm:$0xf]
  %v494 = vld [vmem:[%s481 + $0x30] sm:$0xf]
  %v495 = vld [vmem:[%s481 + $0x34] sm:$0xf]
  %v496 = vld [vmem:[%s481 + $0x38] sm:$0xf]
  %v497 = vld [vmem:[%s481 + $0x3c] sm:$0xf]
  %v498 = vld [vmem:[%s481 + $0x40] sm:$0xf]
  %v499 = vld [vmem:[%s481 + $0x44] sm:$0xf]
  %v500 = vld [vmem:[%s481 + $0x48] sm:$0xf]
  %v501 = vld [vmem:[%s481 + $0x4c] sm:$0xf]
  %v502 = vld [vmem:[%s481 + $0x50] sm:$0xf]
  %v503 = vld [vmem:[%s481 + $0x54] sm:$0xf]
  %v504 = vld [vmem:[%s481 + $0x58] sm:$0xf]
  %v505 = vld [vmem:[%s481 + $0x5c] sm:$0xf]
  %v506 = vld [vmem:[%s481 + $0x60] sm:$0xf]
  %v507 = vld [vmem:[%s481 + $0x64] sm:$0xf]
  %v508 = vld [vmem:[%s481 + $0x68] sm:$0xf]
  %v509 = vld [vmem:[%s481 + $0x6c] sm:$0xf]
  %v510 = vld [vmem:[%s481 + $0x70] sm:$0xf]
  %v511 = vld [vmem:[%s481 + $0x74] sm:$0xf]
  %v512 = vld [vmem:[%s481 + $0x78] sm:$0xf]
  %v513 = vld [vmem:[%s481 + $0x7c] sm:$0xf]
  %v514 = vld [vmem:[%s481 + $0x80] sm:$0xf]
  %v515 = vld [vmem:[%s481 + $0x84] sm:$0xf]
  %v516 = vld [vmem:[%s481 + $0x88] sm:$0xf]
  %v517 = vld [vmem:[%s481 + $0x8c] sm:$0xf]
  %v526 = vunpack.c.l.b16 %v500
  %v527 = vunpack.c.l.b16 %v502
  %v528 = vunpack.c.l.b16 %v504
  %v529 = vunpack.c.l.b16 %v506
  %v530 = vunpack.c.l.b16 %v508
  %v531 = vunpack.c.l.b16 %v510
  %v532 = vunpack.c.l.b16 %v512
  %v533 = vunpack.c.l.b16 %v514
  %v534 = vpack.c.b16 %v526, %v526
  %v535 = vpack.c.b16 %v527, %v527
  %v536 = vpack.c.b16 %v528, %v528
  %v537 = vpack.c.b16 %v529, %v529
  %v538 = vpack.c.b16 %v530, %v530
  %v539 = vpack.c.b16 %v531, %v531
  %v540 = vpack.c.b16 %v532, %v532
  %v541 = vpack.c.b16 %v533, %v533
  %542 = vrot.lane.b32.xlu0 %v534, 12
  %v543 = vpop.permute.xlu0 %542
  %544 = vrot.lane.b32.xlu0 %v535, 12
  %v545 = vpop.permute.xlu0 %544
  %546 = vrot.lane.b32.xlu0 %v536, 12
  %v547 = vpop.permute.xlu0 %546
  %548 = vrot.lane.b32.xlu0 %v537, 12
  %v549 = vpop.permute.xlu0 %548
  %550 = vrot.lane.b32.xlu0 %v538, 12
  %v551 = vpop.permute.xlu0 %550
  %552 = vrot.lane.b32.xlu0 %v539, 12
  %v553 = vpop.permute.xlu0 %552
  %554 = vrot.lane.b32.xlu0 %v540, 12
  %v555 = vpop.permute.xlu0 %554
  %556 = vrot.lane.b32.xlu0 %v541, 12
  %v557 = vpop.permute.xlu0 %556
  %v566 = vunpack.c.l.b16 %v484
  %v567 = vunpack.c.l.b16 %v486
  %v568 = vunpack.c.l.b16 %v488
  %v569 = vunpack.c.l.b16 %v490
  %v570 = vunpack.c.l.b16 %v492
  %v571 = vunpack.c.l.b16 %v494
  %v572 = vunpack.c.l.b16 %v496
  %v573 = vunpack.c.l.b16 %v498
  %v574 = vpack.c.b16 %v566, %v566
  %v575 = vpack.c.b16 %v567, %v567
  %v576 = vpack.c.b16 %v568, %v568
  %v577 = vpack.c.b16 %v569, %v569
  %v578 = vpack.c.b16 %v570, %v570
  %v579 = vpack.c.b16 %v571, %v571
  %v580 = vpack.c.b16 %v572, %v572
  %v581 = vpack.c.b16 %v573, %v573
  %582 = vrot.lane.b32.xlu0 %v574, 24
  %v583 = vpop.permute.xlu0 %582
  %584 = vrot.lane.b32.xlu0 %v575, 24
  %v585 = vpop.permute.xlu0 %584
  %586 = vrot.lane.b32.xlu0 %v576, 24
  %v587 = vpop.permute.xlu0 %586
  %588 = vrot.lane.b32.xlu0 %v577, 24
  %v589 = vpop.permute.xlu0 %588
  %590 = vrot.lane.b32.xlu0 %v578, 24
  %v591 = vpop.permute.xlu0 %590
  %592 = vrot.lane.b32.xlu0 %v579, 24
  %v593 = vpop.permute.xlu0 %592
  %594 = vrot.lane.b32.xlu0 %v580, 24
  %v595 = vpop.permute.xlu0 %594
  %596 = vrot.lane.b32.xlu0 %v581, 24
  %v597 = vpop.permute.xlu0 %596
  %v600 = vsel %vm135, %v482, %v543
  %v603 = vsel %vm135, %v484, %v545
  %v606 = vsel %vm135, %v486, %v547
  %v609 = vsel %vm135, %v488, %v549
  %v612 = vsel %vm135, %v490, %v551
  %v615 = vsel %vm135, %v492, %v553
  %v618 = vsel %vm135, %v494, %v555
  %v621 = vsel %vm135, %v496, %v557
  %v623 = vsel %vm160, %v600, %v583
  %v625 = vsel %vm160, %v603, %v585
  %v627 = vsel %vm160, %v606, %v587
  %v629 = vsel %vm160, %v609, %v589
  %v631 = vsel %vm160, %v612, %v591
  %v633 = vsel %vm160, %v615, %v593
  %v635 = vsel %vm160, %v618, %v595
  %v637 = vsel %vm160, %v621, %v597
  %v638 = vsel %vm177, %v623, 0
  %v639 = vsel %vm177, %v625, 0
  %v640 = vsel %vm177, %v627, 0
  %v641 = vsel %vm177, %v629, 0
  %v642 = vsel %vm177, %v631, 0
  %v643 = vsel %vm177, %v633, 0
  %v644 = vsel %vm177, %v635, 0
  %v645 = vsel %vm177, %v637, 0
  %v654 = vunpack.c.l.b16 %v501
  %v655 = vunpack.c.l.b16 %v503
  %v656 = vunpack.c.l.b16 %v505
  %v657 = vunpack.c.l.b16 %v507
  %v658 = vunpack.c.l.b16 %v509
  %v659 = vunpack.c.l.b16 %v511
  %v660 = vunpack.c.l.b16 %v513
  %v661 = vunpack.c.l.b16 %v515
  %v662 = vpack.c.b16 %v654, %v654
  %v663 = vpack.c.b16 %v655, %v655
  %v664 = vpack.c.b16 %v656, %v656
  %v665 = vpack.c.b16 %v657, %v657
  %v666 = vpack.c.b16 %v658, %v658
  %v667 = vpack.c.b16 %v659, %v659
  %v668 = vpack.c.b16 %v660, %v660
  %v669 = vpack.c.b16 %v661, %v661
  %670 = vrot.lane.b32.xlu0 %v662, 12
  %v671 = vpop.permute.xlu0 %670
  %672 = vrot.lane.b32.xlu0 %v663, 12
  %v673 = vpop.permute.xlu0 %672
  %674 = vrot.lane.b32.xlu0 %v664, 12
  %v675 = vpop.permute.xlu0 %674
  %676 = vrot.lane.b32.xlu0 %v665, 12
  %v677 = vpop.permute.xlu0 %676
  %678 = vrot.lane.b32.xlu0 %v666, 12
  %v679 = vpop.permute.xlu0 %678
  %680 = vrot.lane.b32.xlu0 %v667, 12
  %v681 = vpop.permute.xlu0 %680
  %682 = vrot.lane.b32.xlu0 %v668, 12
  %v683 = vpop.permute.xlu0 %682
  %684 = vrot.lane.b32.xlu0 %v669, 12
  %v685 = vpop.permute.xlu0 %684
  %v694 = vunpack.c.l.b16 %v485
  %v695 = vunpack.c.l.b16 %v487
  %v696 = vunpack.c.l.b16 %v489
  %v697 = vunpack.c.l.b16 %v491
  %v698 = vunpack.c.l.b16 %v493
  %v699 = vunpack.c.l.b16 %v495
  %v700 = vunpack.c.l.b16 %v497
  %v701 = vunpack.c.l.b16 %v499
  %v702 = vpack.c.b16 %v694, %v694
  %v703 = vpack.c.b16 %v695, %v695
  %v704 = vpack.c.b16 %v696, %v696
  %v705 = vpack.c.b16 %v697, %v697
  %v706 = vpack.c.b16 %v698, %v698
  %v707 = vpack.c.b16 %v699, %v699
  %v708 = vpack.c.b16 %v700, %v700
  %v709 = vpack.c.b16 %v701, %v701
  %710 = vrot.lane.b32.xlu0 %v702, 24
  %v711 = vpop.permute.xlu0 %710
  %712 = vrot.lane.b32.xlu0 %v703, 24
  %v713 = vpop.permute.xlu0 %712
  %714 = vrot.lane.b32.xlu0 %v704, 24
  %v715 = vpop.permute.xlu0 %714
  %716 = vrot.lane.b32.xlu0 %v705, 24
  %v717 = vpop.permute.xlu0 %716
  %718 = vrot.lane.b32.xlu0 %v706, 24
  %v719 = vpop.permute.xlu0 %718
  %720 = vrot.lane.b32.xlu0 %v707, 24
  %v721 = vpop.permute.xlu0 %720
  %722 = vrot.lane.b32.xlu0 %v708, 24
  %v723 = vpop.permute.xlu0 %722
  %724 = vrot.lane.b32.xlu0 %v709, 24
  %v725 = vpop.permute.xlu0 %724
  %v728 = vsel %vm135, %v483, %v671
  %v731 = vsel %vm135, %v485, %v673
  %v734 = vsel %vm135, %v487, %v675
  %v737 = vsel %vm135, %v489, %v677
  %v740 = vsel %vm135, %v491, %v679
  %v743 = vsel %vm135, %v493, %v681
  %v746 = vsel %vm135, %v495, %v683
  %v749 = vsel %vm135, %v497, %v685
  %v751 = vsel %vm160, %v728, %v711
  %v753 = vsel %vm160, %v731, %v713
  %v755 = vsel %vm160, %v734, %v715
  %v757 = vsel %vm160, %v737, %v717
  %v759 = vsel %vm160, %v740, %v719
  %v761 = vsel %vm160, %v743, %v721
  %v763 = vsel %vm160, %v746, %v723
  %v765 = vsel %vm160, %v749, %v725
  %v766 = vsel %vm177, %v751, 0
  %v767 = vsel %vm177, %v753, 0
  %v768 = vsel %vm177, %v755, 0
  %v769 = vsel %vm177, %v757, 0
  %v770 = vsel %vm177, %v759, 0
  %v771 = vsel %vm177, %v761, 0
  %v772 = vsel %vm177, %v763, 0
  %v773 = vsel %vm177, %v765, 0
  %774 = vrot.lane.b32.xlu0 %v574, 12
  %v775 = vpop.permute.xlu0 %774
  %776 = vrot.lane.b32.xlu0 %v575, 12
  %v777 = vpop.permute.xlu0 %776
  %778 = vrot.lane.b32.xlu0 %v576, 12
  %v779 = vpop.permute.xlu0 %778
  %780 = vrot.lane.b32.xlu0 %v577, 12
  %v781 = vpop.permute.xlu0 %780
  %782 = vrot.lane.b32.xlu0 %v578, 12
  %v783 = vpop.permute.xlu0 %782
  %784 = vrot.lane.b32.xlu0 %v579, 12
  %v785 = vpop.permute.xlu0 %784
  %786 = vrot.lane.b32.xlu0 %v580, 12
  %v787 = vpop.permute.xlu0 %786
  %788 = vrot.lane.b32.xlu0 %v581, 12
  %v789 = vpop.permute.xlu0 %788
  %v791 = vunpack.c.l.b16 %v516
  %v792 = vpack.c.b16 %v791, %v791
  %793 = vrot.lane.b32.xlu0 %v535, 24
  %v794 = vpop.permute.xlu0 %793
  %795 = vrot.lane.b32.xlu0 %v536, 24
  %v796 = vpop.permute.xlu0 %795
  %797 = vrot.lane.b32.xlu0 %v537, 24
  %v798 = vpop.permute.xlu0 %797
  %799 = vrot.lane.b32.xlu0 %v538, 24
  %v800 = vpop.permute.xlu0 %799
  %801 = vrot.lane.b32.xlu0 %v539, 24
  %v802 = vpop.permute.xlu0 %801
  %803 = vrot.lane.b32.xlu0 %v540, 24
  %v804 = vpop.permute.xlu0 %803
  %805 = vrot.lane.b32.xlu0 %v541, 24
  %v806 = vpop.permute.xlu0 %805
  %807 = vrot.lane.b32.xlu0 %v792, 24
  %v808 = vpop.permute.xlu0 %807
  %v811 = vsel %vm135, %v500, %v775
  %v814 = vsel %vm135, %v502, %v777
  %v817 = vsel %vm135, %v504, %v779
  %v820 = vsel %vm135, %v506, %v781
  %v823 = vsel %vm135, %v508, %v783
  %v826 = vsel %vm135, %v510, %v785
  %v829 = vsel %vm135, %v512, %v787
  %v832 = vsel %vm135, %v514, %v789
  %v834 = vsel %vm160, %v811, %v794
  %v836 = vsel %vm160, %v814, %v796
  %v838 = vsel %vm160, %v817, %v798
  %v840 = vsel %vm160, %v820, %v800
  %v842 = vsel %vm160, %v823, %v802
  %v844 = vsel %vm160, %v826, %v804
  %v846 = vsel %vm160, %v829, %v806
  %v848 = vsel %vm160, %v832, %v808
  %v849 = vsel %vm177, %v834, 0
  %v850 = vsel %vm177, %v836, 0
  %v851 = vsel %vm177, %v838, 0
  %v852 = vsel %vm177, %v840, 0
  %v853 = vsel %vm177, %v842, 0
  %v854 = vsel %vm177, %v844, 0
  %v855 = vsel %vm177, %v846, 0
  %v856 = vsel %vm177, %v848, 0
  %857 = vrot.lane.b32.xlu0 %v702, 12
  %v858 = vpop.permute.xlu0 %857
  %859 = vrot.lane.b32.xlu0 %v703, 12
  %v860 = vpop.permute.xlu0 %859
  %861 = vrot.lane.b32.xlu0 %v704, 12
  %v862 = vpop.permute.xlu0 %861
  %863 = vrot.lane.b32.xlu0 %v705, 12
  %v864 = vpop.permute.xlu0 %863
  %865 = vrot.lane.b32.xlu0 %v706, 12
  %v866 = vpop.permute.xlu0 %865
  %867 = vrot.lane.b32.xlu0 %v707, 12
  %v868 = vpop.permute.xlu0 %867
  %869 = vrot.lane.b32.xlu0 %v708, 12
  %v870 = vpop.permute.xlu0 %869
  %871 = vrot.lane.b32.xlu0 %v709, 12
  %v872 = vpop.permute.xlu0 %871
  %v874 = vunpack.c.l.b16 %v517
  %v875 = vpack.c.b16 %v874, %v874
  %876 = vrot.lane.b32.xlu0 %v663, 24
  %v877 = vpop.permute.xlu0 %876
  %878 = vrot.lane.b32.xlu0 %v664, 24
  %v879 = vpop.permute.xlu0 %878
  %880 = vrot.lane.b32.xlu0 %v665, 24
  %v881 = vpop.permute.xlu0 %880
  %882 = vrot.lane.b32.xlu0 %v666, 24
  %v883 = vpop.permute.xlu0 %882
  %884 = vrot.lane.b32.xlu0 %v667, 24
  %v885 = vpop.permute.xlu0 %884
  %886 = vrot.lane.b32.xlu0 %v668, 24
  %v887 = vpop.permute.xlu0 %886
  %888 = vrot.lane.b32.xlu0 %v669, 24
  %v889 = vpop.permute.xlu0 %888
  %890 = vrot.lane.b32.xlu0 %v875, 24
  %v891 = vpop.permute.xlu0 %890
  %v894 = vsel %vm135, %v501, %v858
  %v897 = vsel %vm135, %v503, %v860
  %v900 = vsel %vm135, %v505, %v862
  %v903 = vsel %vm135, %v507, %v864
  %v906 = vsel %vm135, %v509, %v866
  %v909 = vsel %vm135, %v511, %v868
  %v912 = vsel %vm135, %v513, %v870
  %v915 = vsel %vm135, %v515, %v872
  %v917 = vsel %vm160, %v894, %v877
  %v919 = vsel %vm160, %v897, %v879
  %v921 = vsel %vm160, %v900, %v881
  %v923 = vsel %vm160, %v903, %v883
  %v925 = vsel %vm160, %v906, %v885
  %v927 = vsel %vm160, %v909, %v887
  %v929 = vsel %vm160, %v912, %v889
  %v931 = vsel %vm160, %v915, %v891
  %v932 = vsel %vm177, %v917, 0
  %v933 = vsel %vm177, %v919, 0
  %v934 = vsel %vm177, %v921, 0
  %v935 = vsel %vm177, %v923, 0
  %v936 = vsel %vm177, %v925, 0
  %v937 = vsel %vm177, %v927, 0
  %v938 = vsel %vm177, %v929, 0
  %v939 = vsel %vm177, %v931, 0
  %v948 = vunpack.c.l.b16 %v179
  %v949 = vunpack.c.l.b16 %v180
  %v950 = vunpack.c.l.b16 %v181
  %v951 = vunpack.c.l.b16 %v182
  %v952 = vunpack.c.l.b16 %v183
  %v953 = vunpack.c.l.b16 %v184
  %v954 = vunpack.c.l.b16 %v185
  %v955 = vunpack.c.l.b16 %v186
  %v956 = vpack.c.b16 %v949, %v948
  %v957 = vpack.c.b16 %v951, %v950
  %v958 = vpack.c.b16 %v953, %v952
  %v959 = vpack.c.b16 %v955, %v954
  %v972 = vunpack.c.l.b16 %v307
  %v973 = vunpack.c.l.b16 %v308
  %v974 = vunpack.c.l.b16 %v309
  %v975 = vunpack.c.l.b16 %v310
  %v976 = vunpack.c.l.b16 %v311
  %v977 = vunpack.c.l.b16 %v312
  %v978 = vunpack.c.l.b16 %v313
  %v979 = vunpack.c.l.b16 %v314
  %v980 = vpack.c.b16 %v973, %v972
  %v981 = vpack.c.b16 %v975, %v974
  %v982 = vpack.c.b16 %v977, %v976
  %v983 = vpack.c.b16 %v979, %v978
  %v996 = vunpack.c.l.b16 %v390
  %v997 = vunpack.c.l.b16 %v391
  %v998 = vunpack.c.l.b16 %v392
  %v999 = vunpack.c.l.b16 %v393
  %v1000 = vunpack.c.l.b16 %v394
  %v1001 = vunpack.c.l.b16 %v395
  %v1002 = vunpack.c.l.b16 %v396
  %v1003 = vunpack.c.l.b16 %v397
  %v1004 = vpack.c.b16 %v997, %v996
  %v1005 = vpack.c.b16 %v999, %v998
  %v1006 = vpack.c.b16 %v1001, %v1000
  %v1007 = vpack.c.b16 %v1003, %v1002
  %v1020 = vunpack.c.l.b16 %v473
  %v1021 = vunpack.c.l.b16 %v474
  %v1022 = vunpack.c.l.b16 %v475
  %v1023 = vunpack.c.l.b16 %v476
  %v1024 = vunpack.c.l.b16 %v477
  %v1025 = vunpack.c.l.b16 %v478
  %v1026 = vunpack.c.l.b16 %v479
  %v1027 = vunpack.c.l.b16 %v480
  %v1028 = vpack.c.b16 %v1021, %v1020
  %v1029 = vpack.c.b16 %v1023, %v1022
  %v1030 = vpack.c.b16 %v1025, %v1024
  %v1031 = vpack.c.b16 %v1027, %v1026
  %v1044 = vunpack.c.l.b16 %v638
  %v1045 = vunpack.c.l.b16 %v639
  %v1046 = vunpack.c.l.b16 %v640
  %v1047 = vunpack.c.l.b16 %v641
  %v1048 = vunpack.c.l.b16 %v642
  %v1049 = vunpack.c.l.b16 %v643
  %v1050 = vunpack.c.l.b16 %v644
  %v1051 = vunpack.c.l.b16 %v645
  %v1052 = vpack.c.b16 %v1045, %v1044
  %v1053 = vpack.c.b16 %v1047, %v1046
  %v1054 = vpack.c.b16 %v1049, %v1048
  %v1055 = vpack.c.b16 %v1051, %v1050
  %v1068 = vunpack.c.l.b16 %v766
  %v1069 = vunpack.c.l.b16 %v767
  %v1070 = vunpack.c.l.b16 %v768
  %v1071 = vunpack.c.l.b16 %v769
  %v1072 = vunpack.c.l.b16 %v770
  %v1073 = vunpack.c.l.b16 %v771
  %v1074 = vunpack.c.l.b16 %v772
  %v1075 = vunpack.c.l.b16 %v773
  %v1076 = vpack.c.b16 %v1069, %v1068
  %v1077 = vpack.c.b16 %v1071, %v1070
  %v1078 = vpack.c.b16 %v1073, %v1072
  %v1079 = vpack.c.b16 %v1075, %v1074
  %v1092 = vunpack.c.l.b16 %v849
  %v1093 = vunpack.c.l.b16 %v850
  %v1094 = vunpack.c.l.b16 %v851
  %v1095 = vunpack.c.l.b16 %v852
  %v1096 = vunpack.c.l.b16 %v853
  %v1097 = vunpack.c.l.b16 %v854
  %v1098 = vunpack.c.l.b16 %v855
  %v1099 = vunpack.c.l.b16 %v856
  %v1100 = vpack.c.b16 %v1093, %v1092
  %v1101 = vpack.c.b16 %v1095, %v1094
  %v1102 = vpack.c.b16 %v1097, %v1096
  %v1103 = vpack.c.b16 %v1099, %v1098
  %v1116 = vunpack.c.l.b16 %v932
  %v1117 = vunpack.c.l.b16 %v933
  %v1118 = vunpack.c.l.b16 %v934
  %v1119 = vunpack.c.l.b16 %v935
  %v1120 = vunpack.c.l.b16 %v936
  %v1121 = vunpack.c.l.b16 %v937
  %v1122 = vunpack.c.l.b16 %v938
  %v1123 = vunpack.c.l.b16 %v939
  %v1124 = vpack.c.b16 %v1117, %v1116
  %v1125 = vpack.c.b16 %v1119, %v1118
  %v1126 = vpack.c.b16 %v1121, %v1120
  %v1127 = vpack.c.b16 %v1123, %v1122
  %v1132 = vld [vmem:[%s1] sm:$0xf]
  %v1133 = vld [vmem:[%s1 + $0x4] sm:$0xf]
  %v1134 = vld [vmem:[%s1 + $0x8] sm:$0xf]
  %v1135 = vld [vmem:[%s1 + $0xc] sm:$0xf]
  %v1136 = vld [vmem:[%s1 + $0x10] sm:$0xf]
  %v1137 = vld [vmem:[%s1 + $0x14] sm:$0xf]
  %v1138 = vld [vmem:[%s1 + $0x18] sm:$0xf]
  %v1139 = vld [vmem:[%s1 + $0x1c] sm:$0xf]
  %v1140 = vld [vmem:[%s1 + $0x20] sm:$0xf]
  %v1141 = vld [vmem:[%s1 + $0x24] sm:$0xf]
  %v1142 = vld [vmem:[%s1 + $0x28] sm:$0xf]
  %v1143 = vld [vmem:[%s1 + $0x2c] sm:$0xf]
  %v1144 = vld [vmem:[%s1 + $0x30] sm:$0xf]
  %v1145 = vld [vmem:[%s1 + $0x34] sm:$0xf]
  %v1146 = vld [vmem:[%s1 + $0x38] sm:$0xf]
  %v1147 = vld [vmem:[%s1 + $0x3c] sm:$0xf]
  %v1148 = vld [vmem:[%s2] sm:$0x1]
  %v1150 = vlaneseq
  %v1151 = vshrl.u32 %v1150, 7
  %v1152 = vsub.s32 0, %v1151
  %v1153 = vrot.slane %v1148, %v1152
  %v1171 = vunpack.c.l.b16 %v1132
  %v1172 = vunpack.c.l.b16 %v1133
  %v1173 = vunpack.c.l.b16 %v1134
  %v1174 = vunpack.c.l.b16 %v1135
  %v1175 = vunpack.c.l.b16 %v1136
  %v1176 = vunpack.c.l.b16 %v1137
  %v1177 = vunpack.c.l.b16 %v1138
  %v1178 = vunpack.c.l.b16 %v1139
  %v1179 = vunpack.c.l.b16 %v1140
  %v1180 = vunpack.c.l.b16 %v1141
  %v1181 = vunpack.c.l.b16 %v1142
  %v1182 = vunpack.c.l.b16 %v1143
  %v1183 = vunpack.c.l.b16 %v1144
  %v1184 = vunpack.c.l.b16 %v1145
  %v1185 = vunpack.c.l.b16 %v1146
  %v1186 = vunpack.c.l.b16 %v1147
  %v1187 = vpack.c.b16 %v1172, %v1171
  %v1188 = vpack.c.b16 %v1174, %v1173
  %v1189 = vpack.c.b16 %v1176, %v1175
  %v1190 = vpack.c.b16 %v1178, %v1177
  %v1191 = vpack.c.b16 %v1180, %v1179
  %v1192 = vpack.c.b16 %v1182, %v1181
  %v1193 = vpack.c.b16 %v1184, %v1183
  %v1194 = vpack.c.b16 %v1186, %v1185
  %1203 = vmatprep.subr.bf16.mxu0 0
  %1204 = vmatpush1.bf16.msra.mxu0 %v1187
  %1205 = vmatprep.subr.bf16.mxu0 0
  %1206 = vmatpush1.bf16.msra.mxu0 %v1188
  %1207 = vmatprep.subr.bf16.mxu0 0
  %1208 = vmatpush1.bf16.msra.mxu0 %v1189
  %1209 = vmatprep.subr.bf16.mxu0 0
  %1210 = vmatpush1.bf16.msra.mxu0 %v1190
  %1211 = vmatprep.subr.bf16.mxu0 0
  %1212 = vmatpush1.bf16.msra.mxu0 %v1191
  %1213 = vmatprep.subr.bf16.mxu0 0
  %1214 = vmatpush1.bf16.msra.mxu0 %v1192
  %1215 = vmatprep.subr.bf16.mxu0 0
  %1216 = vmatpush1.bf16.msra.mxu0 %v1193
  %1217 = vmatprep.subr.bf16.mxu0 0
  %1218 = vmatpush1.bf16.msra.mxu0 %v1194
  %1219 = vmatprep.subr.bf16.mxu0 0
  %1220 = vmatpush1.bf16.msra.mxu0 0
  %1221 = vmatprep.subr.bf16.mxu0 0
  %1222 = vmatpush1.bf16.msra.mxu0 0
  %1223 = vmatprep.subr.bf16.mxu0 0
  %1224 = vmatpush1.bf16.msra.mxu0 0
  %1225 = vmatprep.subr.bf16.mxu0 0
  %1226 = vmatpush1.bf16.msra.mxu0 0
  %1227 = vmatprep.subr.bf16.mxu0 0
  %1228 = vmatpush1.bf16.msra.mxu0 0
  %1229 = vmatprep.subr.bf16.mxu0 0
  %1230 = vmatpush1.bf16.msra.mxu0 0
  %1231 = vmatprep.subr.bf16.mxu0 0
  %1232 = vmatpush1.bf16.msra.mxu0 0
  %1233 = vmatprep.subr.bf16.mxu0 0
  %1234 = vmatpush1.bf16.msra.mxu0 0
  %1235 = vmatprep.mubr.bf16.mxu0 0
  %1236 = vmatmul.mubr.bf16.gmra.mrb[0].mxu0 %v956
  %v1237 = vpop.f32.mrb[0].mxu0
  %v1238 = vadd.f32 %v1153, %v1237
  %v1239 = vpop.f32.mrb[0].mxu0
  %v1240 = vpop.f32.mrb[0].mxu0
  %v1241 = vadd.f32 %v1153, %v1240
  %v1242 = vpop.f32.mrb[0].mxu0
  %1243 = vmatprep.mubr.bf16.mxu0 0
  %1244 = vmatmul.mubr.bf16.gmra.mrb[0].mxu0 %v957
  %v1245 = vpop.f32.mrb[0].mxu0
  %v1246 = vadd.f32 %v1153, %v1245
  %v1247 = vpop.f32.mrb[0].mxu0
  %v1248 = vpop.f32.mrb[0].mxu0
  %v1249 = vadd.f32 %v1153, %v1248
  %v1250 = vpop.f32.mrb[0].mxu0
  %1251 = vmatprep.mubr.bf16.mxu0 0
  %1252 = vmatmul.mubr.bf16.gmra.mrb[0].mxu0 %v958
  %v1253 = vpop.f32.mrb[0].mxu0
  %v1254 = vadd.f32 %v1153, %v1253
  %v1255 = vpop.f32.mrb[0].mxu0
  %v1256 = vpop.f32.mrb[0].mxu0
  %v1257 = vadd.f32 %v1153, %v1256
  %v1258 = vpop.f32.mrb[0].mxu0
  %1259 = vmatprep.mubr.bf16.mxu0 0
  %1260 = vmatmul.mubr.bf16.gmra.mrb[0].mxu0 %v959
  %v1261 = vpop.f32.mrb[0].mxu0
  %v1262 = vadd.f32 %v1153, %v1261
  %v1263 = vpop.f32.mrb[0].mxu0
  %v1264 = vpop.f32.mrb[0].mxu0
  %v1265 = vadd.f32 %v1153, %v1264
  %v1266 = vpop.f32.mrb[0].mxu0
  %1267 = vmatprep.mubr.bf16.mxu0 0
  %1268 = vmatmul.mubr.bf16.gmra.mrb[0].mxu0 %v980
  %v1269 = vpop.f32.mrb[0].mxu0
  %v1270 = vadd.f32 %v1153, %v1269
  %v1271 = vpop.f32.mrb[0].mxu0
  %v1272 = vpop.f32.mrb[0].mxu0
  %v1273 = vadd.f32 %v1153, %v1272
  %v1274 = vpop.f32.mrb[0].mxu0
  %1275 = vmatprep.mubr.bf16.mxu0 0
  %1276 = vmatmul.mubr.bf16.gmra.mrb[0].mxu0 %v981
  %v1277 = vpop.f32.mrb[0].mxu0
  %v1278 = vadd.f32 %v1153, %v1277
  %v1279 = vpop.f32.mrb[0].mxu0
  %v1280 = vpop.f32.mrb[0].mxu0
  %v1281 = vadd.f32 %v1153, %v1280
  %v1282 = vpop.f32.mrb[0].mxu0
  %1283 = vmatprep.mubr.bf16.mxu0 0
  %1284 = vmatmul.mubr.bf16.gmra.mrb[0].mxu0 %v982
  %v1285 = vpop.f32.mrb[0].mxu0
  %v1286 = vadd.f32 %v1153, %v1285
  %v1287 = vpop.f32.mrb[0].mxu0
  %v1288 = vpop.f32.mrb[0].mxu0
  %v1289 = vadd.f32 %v1153, %v1288
  %v1290 = vpop.f32.mrb[0].mxu0
  %1291 = vmatprep.mubr.bf16.mxu0 0
  %1292 = vmatmul.mubr.bf16.gmra.mrb[0].mxu0 %v983
  %v1293 = vpop.f32.mrb[0].mxu0
  %v1294 = vadd.f32 %v1153, %v1293
  %v1295 = vpop.f32.mrb[0].mxu0
  %v1296 = vpop.f32.mrb[0].mxu0
  %v1297 = vadd.f32 %v1153, %v1296
  %v1298 = vpop.f32.mrb[0].mxu0
  %1299 = vmatprep.mubr.bf16.mxu0 0
  %1300 = vmatmul.mubr.bf16.gmra.mrb[0].mxu0 %v1004
  %v1301 = vpop.f32.mrb[0].mxu0
  %v1302 = vadd.f32 %v1153, %v1301
  %v1303 = vpop.f32.mrb[0].mxu0
  %v1304 = vpop.f32.mrb[0].mxu0
  %v1305 = vadd.f32 %v1153, %v1304
  %v1306 = vpop.f32.mrb[0].mxu0
  %1307 = vmatprep.mubr.bf16.mxu0 0
  %1308 = vmatmul.mubr.bf16.gmra.mrb[0].mxu0 %v1005
  %v1309 = vpop.f32.mrb[0].mxu0
  %v1310 = vadd.f32 %v1153, %v1309
  %v1311 = vpop.f32.mrb[0].mxu0
  %v1312 = vpop.f32.mrb[0].mxu0
  %v1313 = vadd.f32 %v1153, %v1312
  %v1314 = vpop.f32.mrb[0].mxu0
  %1315 = vmatprep.mubr.bf16.mxu0 0
  %1316 = vmatmul.mubr.bf16.gmra.mrb[0].mxu0 %v1006
  %v1317 = vpop.f32.mrb[0].mxu0
  %v1318 = vadd.f32 %v1153, %v1317
  %v1319 = vpop.f32.mrb[0].mxu0
  %v1320 = vpop.f32.mrb[0].mxu0
  %v1321 = vadd.f32 %v1153, %v1320
  %v1322 = vpop.f32.mrb[0].mxu0
  %1323 = vmatprep.mubr.bf16.mxu0 0
  %1324 = vmatmul.mubr.bf16.gmra.mrb[0].mxu0 %v1007
  %v1325 = vpop.f32.mrb[0].mxu0
  %v1326 = vadd.f32 %v1153, %v1325
  %v1327 = vpop.f32.mrb[0].mxu0
  %v1328 = vpop.f32.mrb[0].mxu0
  %v1329 = vadd.f32 %v1153, %v1328
  %v1330 = vpop.f32.mrb[0].mxu0
  %1331 = vmatprep.mubr.bf16.mxu0 0
  %1332 = vmatmul.mubr.bf16.gmra.mrb[0].mxu0 %v1028
  %v1333 = vpop.f32.mrb[0].mxu0
  %v1334 = vadd.f32 %v1153, %v1333
  %v1335 = vpop.f32.mrb[0].mxu0
  %v1336 = vpop.f32.mrb[0].mxu0
  %v1337 = vadd.f32 %v1153, %v1336
  %v1338 = vpop.f32.mrb[0].mxu0
  %1339 = vmatprep.mubr.bf16.mxu0 0
  %1340 = vmatmul.mubr.bf16.gmra.mrb[0].mxu0 %v1029
  %v1341 = vpop.f32.mrb[0].mxu0
  %v1342 = vadd.f32 %v1153, %v1341
  %v1343 = vpop.f32.mrb[0].mxu0
  %v1344 = vpop.f32.mrb[0].mxu0
  %v1345 = vadd.f32 %v1153, %v1344
  %v1346 = vpop.f32.mrb[0].mxu0
  %1347 = vmatprep.mubr.bf16.mxu0 0
  %1348 = vmatmul.mubr.bf16.gmra.mrb[0].mxu0 %v1030
  %v1349 = vpop.f32.mrb[0].mxu0
  %v1350 = vadd.f32 %v1153, %v1349
  %v1351 = vpop.f32.mrb[0].mxu0
  %v1352 = vpop.f32.mrb[0].mxu0
  %v1353 = vadd.f32 %v1153, %v1352
  %v1354 = vpop.f32.mrb[0].mxu0
  %1355 = vmatprep.mubr.bf16.mxu0 0
  %1356 = vmatmul.mubr.bf16.gmra.mrb[0].mxu0 %v1031
  %v1357 = vpop.f32.mrb[0].mxu0
  %v1358 = vadd.f32 %v1153, %v1357
  %v1359 = vpop.f32.mrb[0].mxu0
  %v1360 = vpop.f32.mrb[0].mxu0
  %v1361 = vadd.f32 %v1153, %v1360
  %v1362 = vpop.f32.mrb[0].mxu0
  %1363 = vmatprep.mubr.bf16.mxu0 0
  %1364 = vmatmul.mubr.bf16.gmra.mrb[0].mxu0 %v1052
  %v1365 = vpop.f32.mrb[0].mxu0
  %v1366 = vadd.f32 %v1153, %v1365
  %v1367 = vpop.f32.mrb[0].mxu0
  %v1368 = vpop.f32.mrb[0].mxu0
  %v1369 = vadd.f32 %v1153, %v1368
  %v1370 = vpop.f32.mrb[0].mxu0
  %1371 = vmatprep.mubr.bf16.mxu0 0
  %1372 = vmatmul.mubr.bf16.gmra.mrb[0].mxu0 %v1053
  %v1373 = vpop.f32.mrb[0].mxu0
  %v1374 = vadd.f32 %v1153, %v1373
  %v1375 = vpop.f32.mrb[0].mxu0
  %v1376 = vpop.f32.mrb[0].mxu0
  %v1377 = vadd.f32 %v1153, %v1376
  %v1378 = vpop.f32.mrb[0].mxu0
  %1379 = vmatprep.mubr.bf16.mxu0 0
  %1380 = vmatmul.mubr.bf16.gmra.mrb[0].mxu0 %v1054
  %v1381 = vpop.f32.mrb[0].mxu0
  %v1382 = vadd.f32 %v1153, %v1381
  %v1383 = vpop.f32.mrb[0].mxu0
  %v1384 = vpop.f32.mrb[0].mxu0
  %v1385 = vadd.f32 %v1153, %v1384
  %v1386 = vpop.f32.mrb[0].mxu0
  %1387 = vmatprep.mubr.bf16.mxu0 0
  %1388 = vmatmul.mubr.bf16.gmra.mrb[0].mxu0 %v1055
  %v1389 = vpop.f32.mrb[0].mxu0
  %v1390 = vadd.f32 %v1153, %v1389
  %v1391 = vpop.f32.mrb[0].mxu0
  %v1392 = vpop.f32.mrb[0].mxu0
  %v1393 = vadd.f32 %v1153, %v1392
  %v1394 = vpop.f32.mrb[0].mxu0
  %1395 = vmatprep.mubr.bf16.mxu0 0
  %1396 = vmatmul.mubr.bf16.gmra.mrb[0].mxu0 %v1076
  %v1397 = vpop.f32.mrb[0].mxu0
  %v1398 = vadd.f32 %v1153, %v1397
  %v1399 = vpop.f32.mrb[0].mxu0
  %v1400 = vpop.f32.mrb[0].mxu0
  %v1401 = vadd.f32 %v1153, %v1400
  %v1402 = vpop.f32.mrb[0].mxu0
  %1403 = vmatprep.mubr.bf16.mxu0 0
  %1404 = vmatmul.mubr.bf16.gmra.mrb[0].mxu0 %v1077
  %v1405 = vpop.f32.mrb[0].mxu0
  %v1406 = vadd.f32 %v1153, %v1405
  %v1407 = vpop.f32.mrb[0].mxu0
  %v1408 = vpop.f32.mrb[0].mxu0
  %v1409 = vadd.f32 %v1153, %v1408
  %v1410 = vpop.f32.mrb[0].mxu0
  %1411 = vmatprep.mubr.bf16.mxu0 0
  %1412 = vmatmul.mubr.bf16.gmra.mrb[0].mxu0 %v1078
  %v1413 = vpop.f32.mrb[0].mxu0
  %v1414 = vadd.f32 %v1153, %v1413
  %v1415 = vpop.f32.mrb[0].mxu0
  %v1416 = vpop.f32.mrb[0].mxu0
  %v1417 = vadd.f32 %v1153, %v1416
  %v1418 = vpop.f32.mrb[0].mxu0
  %1419 = vmatprep.mubr.bf16.mxu0 0
  %1420 = vmatmul.mubr.bf16.gmra.mrb[0].mxu0 %v1079
  %v1421 = vpop.f32.mrb[0].mxu0
  %v1422 = vadd.f32 %v1153, %v1421
  %v1423 = vpop.f32.mrb[0].mxu0
  %v1424 = vpop.f32.mrb[0].mxu0
  %v1425 = vadd.f32 %v1153, %v1424
  %v1426 = vpop.f32.mrb[0].mxu0
  %1427 = vmatprep.mubr.bf16.mxu0 0
  %1428 = vmatmul.mubr.bf16.gmra.mrb[0].mxu0 %v1100
  %v1429 = vpop.f32.mrb[0].mxu0
  %v1430 = vadd.f32 %v1153, %v1429
  %v1431 = vpop.f32.mrb[0].mxu0
  %v1432 = vpop.f32.mrb[0].mxu0
  %v1433 = vadd.f32 %v1153, %v1432
  %v1434 = vpop.f32.mrb[0].mxu0
  %1435 = vmatprep.mubr.bf16.mxu0 0
  %1436 = vmatmul.mubr.bf16.gmra.mrb[0].mxu0 %v1101
  %v1437 = vpop.f32.mrb[0].mxu0
  %v1438 = vadd.f32 %v1153, %v1437
  %v1439 = vpop.f32.mrb[0].mxu0
  %v1440 = vpop.f32.mrb[0].mxu0
  %v1441 = vadd.f32 %v1153, %v1440
  %v1442 = vpop.f32.mrb[0].mxu0
  %1443 = vmatprep.mubr.bf16.mxu0 0
  %1444 = vmatmul.mubr.bf16.gmra.mrb[0].mxu0 %v1102
  %v1445 = vpop.f32.mrb[0].mxu0
  %v1446 = vadd.f32 %v1153, %v1445
  %v1447 = vpop.f32.mrb[0].mxu0
  %v1448 = vpop.f32.mrb[0].mxu0
  %v1449 = vadd.f32 %v1153, %v1448
  %v1450 = vpop.f32.mrb[0].mxu0
  %1451 = vmatprep.mubr.bf16.mxu0 0
  %1452 = vmatmul.mubr.bf16.gmra.mrb[0].mxu0 %v1103
  %v1453 = vpop.f32.mrb[0].mxu0
  %v1454 = vadd.f32 %v1153, %v1453
  %v1455 = vpop.f32.mrb[0].mxu0
  %v1456 = vpop.f32.mrb[0].mxu0
  %v1457 = vadd.f32 %v1153, %v1456
  %v1458 = vpop.f32.mrb[0].mxu0
  %1459 = vmatprep.mubr.bf16.mxu0 0
  %1460 = vmatmul.mubr.bf16.gmra.mrb[0].mxu0 %v1124
  %v1461 = vpop.f32.mrb[0].mxu0
  %v1462 = vadd.f32 %v1153, %v1461
  %v1463 = vpop.f32.mrb[0].mxu0
  %v1464 = vpop.f32.mrb[0].mxu0
  %v1465 = vadd.f32 %v1153, %v1464
  %v1466 = vpop.f32.mrb[0].mxu0
  %1467 = vmatprep.mubr.bf16.mxu0 0
  %1468 = vmatmul.mubr.bf16.gmra.mrb[0].mxu0 %v1125
  %v1469 = vpop.f32.mrb[0].mxu0
  %v1470 = vadd.f32 %v1153, %v1469
  %v1471 = vpop.f32.mrb[0].mxu0
  %v1472 = vpop.f32.mrb[0].mxu0
  %v1473 = vadd.f32 %v1153, %v1472
  %v1474 = vpop.f32.mrb[0].mxu0
  %1475 = vmatprep.mubr.bf16.mxu0 0
  %1476 = vmatmul.mubr.bf16.gmra.mrb[0].mxu0 %v1126
  %v1477 = vpop.f32.mrb[0].mxu0
  %v1478 = vadd.f32 %v1153, %v1477
  %v1479 = vpop.f32.mrb[0].mxu0
  %v1480 = vpop.f32.mrb[0].mxu0
  %v1481 = vadd.f32 %v1153, %v1480
  %v1482 = vpop.f32.mrb[0].mxu0
  %1483 = vmatprep.mubr.bf16.mxu0 0
  %1484 = vmatmul.mubr.bf16.gmra.mrb[0].mxu0 %v1127
  %v1485 = vpop.f32.mrb[0].mxu0
  %v1486 = vadd.f32 %v1153, %v1485
  %v1487 = vpop.f32.mrb[0].mxu0
  %v1488 = vpop.f32.mrb[0].mxu0
  %v1489 = vadd.f32 %v1153, %v1488
  %v1490 = vpop.f32.mrb[0].mxu0
  %1491 = vdwg.mxu0
  %v1492 = vmax.f32 %v1238, 0.0
  %v1493 = vmax.f32 %v1241, 0.0
  %v1494 = vmax.f32 %v1246, 0.0
  %v1495 = vmax.f32 %v1249, 0.0
  %v1496 = vmax.f32 %v1254, 0.0
  %v1497 = vmax.f32 %v1257, 0.0
  %v1498 = vmax.f32 %v1262, 0.0
  %v1499 = vmax.f32 %v1265, 0.0
  %v1500 = vmax.f32 %v1270, 0.0
  %v1501 = vmax.f32 %v1273, 0.0
  %v1502 = vmax.f32 %v1278, 0.0
  %v1503 = vmax.f32 %v1281, 0.0
  %v1504 = vmax.f32 %v1286, 0.0
  %v1505 = vmax.f32 %v1289, 0.0
  %v1506 = vmax.f32 %v1294, 0.0
  %v1507 = vmax.f32 %v1297, 0.0
  %v1508 = vmax.f32 %v1302, 0.0
  %v1509 = vmax.f32 %v1305, 0.0
  %v1510 = vmax.f32 %v1310, 0.0
  %v1511 = vmax.f32 %v1313, 0.0
  %v1512 = vmax.f32 %v1318, 0.0
  %v1513 = vmax.f32 %v1321, 0.0
  %v1514 = vmax.f32 %v1326, 0.0
  %v1515 = vmax.f32 %v1329, 0.0
  %v1516 = vmax.f32 %v1334, 0.0
  %v1517 = vmax.f32 %v1337, 0.0
  %v1518 = vmax.f32 %v1342, 0.0
  %v1519 = vmax.f32 %v1345, 0.0
  %v1520 = vmax.f32 %v1350, 0.0
  %v1521 = vmax.f32 %v1353, 0.0
  %v1522 = vmax.f32 %v1358, 0.0
  %v1523 = vmax.f32 %v1361, 0.0
  %v1524 = vmax.f32 %v1366, 0.0
  %v1525 = vmax.f32 %v1369, 0.0
  %v1526 = vmax.f32 %v1374, 0.0
  %v1527 = vmax.f32 %v1377, 0.0
  %v1528 = vmax.f32 %v1382, 0.0
  %v1529 = vmax.f32 %v1385, 0.0
  %v1530 = vmax.f32 %v1390, 0.0
  %v1531 = vmax.f32 %v1393, 0.0
  %v1532 = vmax.f32 %v1398, 0.0
  %v1533 = vmax.f32 %v1401, 0.0
  %v1534 = vmax.f32 %v1406, 0.0
  %v1535 = vmax.f32 %v1409, 0.0
  %v1536 = vmax.f32 %v1414, 0.0
  %v1537 = vmax.f32 %v1417, 0.0
  %v1538 = vmax.f32 %v1422, 0.0
  %v1539 = vmax.f32 %v1425, 0.0
  %v1540 = vmax.f32 %v1430, 0.0
  %v1541 = vmax.f32 %v1433, 0.0
  %v1542 = vmax.f32 %v1438, 0.0
  %v1543 = vmax.f32 %v1441, 0.0
  %v1544 = vmax.f32 %v1446, 0.0
  %v1545 = vmax.f32 %v1449, 0.0
  %v1546 = vmax.f32 %v1454, 0.0
  %v1547 = vmax.f32 %v1457, 0.0
  %v1548 = vmax.f32 %v1462, 0.0
  %v1549 = vmax.f32 %v1465, 0.0
  %v1550 = vmax.f32 %v1470, 0.0
  %v1551 = vmax.f32 %v1473, 0.0
  %v1552 = vmax.f32 %v1478, 0.0
  %v1553 = vmax.f32 %v1481, 0.0
  %v1554 = vmax.f32 %v1486, 0.0
  %v1555 = vmax.f32 %v1489, 0.0
  %v1556 = vadd.f32 %v1492, %v1493
  %v1557 = vadd.f32 %v1556, %v1494
  %v1558 = vadd.f32 %v1557, %v1495
  %v1559 = vadd.f32 %v1558, %v1496
  %v1560 = vadd.f32 %v1559, %v1497
  %v1561 = vadd.f32 %v1560, %v1498
  %v1562 = vadd.f32 %v1561, %v1499
  %v1563 = vadd.f32 %v1562, %v1500
  %v1564 = vadd.f32 %v1563, %v1501
  %v1565 = vadd.f32 %v1564, %v1502
  %v1566 = vadd.f32 %v1565, %v1503
  %v1567 = vadd.f32 %v1566, %v1504
  %v1568 = vadd.f32 %v1567, %v1505
  %v1569 = vadd.f32 %v1568, %v1506
  %v1570 = vadd.f32 %v1569, %v1507
  %v1571 = vadd.f32 %v1570, %v1508
  %v1572 = vadd.f32 %v1571, %v1509
  %v1573 = vadd.f32 %v1572, %v1510
  %v1574 = vadd.f32 %v1573, %v1511
  %v1575 = vadd.f32 %v1574, %v1512
  %v1576 = vadd.f32 %v1575, %v1513
  %v1577 = vadd.f32 %v1576, %v1514
  %v1578 = vadd.f32 %v1577, %v1515
  %v1579 = vadd.f32 %v1578, %v1516
  %v1580 = vadd.f32 %v1579, %v1517
  %v1581 = vadd.f32 %v1580, %v1518
  %v1582 = vadd.f32 %v1581, %v1519
  %v1583 = vadd.f32 %v1582, %v1520
  %v1584 = vadd.f32 %v1583, %v1521
  %v1585 = vadd.f32 %v1584, %v1522
  %v1586 = vadd.f32 %v1585, %v1523
  %v1587 = vadd.f32 %v1586, %v1524
  %v1588 = vadd.f32 %v1587, %v1525
  %v1589 = vadd.f32 %v1588, %v1526
  %v1590 = vadd.f32 %v1589, %v1527
  %v1591 = vadd.f32 %v1590, %v1528
  %v1592 = vadd.f32 %v1591, %v1529
  %v1593 = vadd.f32 %v1592, %v1530
  %v1594 = vadd.f32 %v1593, %v1531
  %v1595 = vadd.f32 %v1594, %v1532
  %v1596 = vadd.f32 %v1595, %v1533
  %v1597 = vadd.f32 %v1596, %v1534
  %v1598 = vadd.f32 %v1597, %v1535
  %v1599 = vadd.f32 %v1598, %v1536
  %v1600 = vadd.f32 %v1599, %v1537
  %v1601 = vadd.f32 %v1600, %v1538
  %v1602 = vadd.f32 %v1601, %v1539
  %v1603 = vadd.f32 %v1602, %v1540
  %v1604 = vadd.f32 %v1603, %v1541
  %v1605 = vadd.f32 %v1604, %v1542
  %v1606 = vadd.f32 %v1605, %v1543
  %v1607 = vadd.f32 %v1606, %v1544
  %v1608 = vadd.f32 %v1607, %v1545
  %v1609 = vadd.f32 %v1608, %v1546
  %v1610 = vadd.f32 %v1609, %v1547
  %v1611 = vadd.f32 %v1610, %v1548
  %v1612 = vadd.f32 %v1611, %v1549
  %v1613 = vadd.f32 %v1612, %v1550
  %v1614 = vadd.f32 %v1613, %v1551
  %v1615 = vadd.f32 %v1614, %v1552
  %v1616 = vadd.f32 %v1615, %v1553
  %v1617 = vadd.f32 %v1616, %v1554
  %v1618 = vadd.f32 %v1617, %v1555
  %v1619 = vrot.slane %v1618, 4
  %v1620 = vadd.f32 %v1618, %v1619
  %v1621 = vrot.slane %v1620, 2
  %v1622 = vadd.f32 %v1620, %v1621
  %v1623 = vrot.slane %v1622, 1
  %v1624 = vadd.f32 %v1622, %v1623
  %1625 = vst [vmem:[%s3] sm:$0x1] %v1624
  %v1626 = vmul.f32 %v1492, %v1492
  %v1627 = vmul.f32 %v1493, %v1493
  %v1628 = vmul.f32 %v1494, %v1494
  %v1629 = vmul.f32 %v1495, %v1495
  %v1630 = vmul.f32 %v1496, %v1496
  %v1631 = vmul.f32 %v1497, %v1497
  %v1632 = vmul.f32 %v1498, %v1498
  %v1633 = vmul.f32 %v1499, %v1499
  %v1634 = vmul.f32 %v1500, %v1500
  %v1635 = vmul.f32 %v1501, %v1501
  %v1636 = vmul.f32 %v1502, %v1502
  %v1637 = vmul.f32 %v1503, %v1503
  %v1638 = vmul.f32 %v1504, %v1504
  %v1639 = vmul.f32 %v1505, %v1505
  %v1640 = vmul.f32 %v1506, %v1506
  %v1641 = vmul.f32 %v1507, %v1507
  %v1642 = vmul.f32 %v1508, %v1508
  %v1643 = vmul.f32 %v1509, %v1509
  %v1644 = vmul.f32 %v1510, %v1510
  %v1645 = vmul.f32 %v1511, %v1511
  %v1646 = vmul.f32 %v1512, %v1512
  %v1647 = vmul.f32 %v1513, %v1513
  %v1648 = vmul.f32 %v1514, %v1514
  %v1649 = vmul.f32 %v1515, %v1515
  %v1650 = vmul.f32 %v1516, %v1516
  %v1651 = vmul.f32 %v1517, %v1517
  %v1652 = vmul.f32 %v1518, %v1518
  %v1653 = vmul.f32 %v1519, %v1519
  %v1654 = vmul.f32 %v1520, %v1520
  %v1655 = vmul.f32 %v1521, %v1521
  %v1656 = vmul.f32 %v1522, %v1522
  %v1657 = vmul.f32 %v1523, %v1523
  %v1658 = vmul.f32 %v1524, %v1524
  %v1659 = vmul.f32 %v1525, %v1525
  %v1660 = vmul.f32 %v1526, %v1526
  %v1661 = vmul.f32 %v1527, %v1527
  %v1662 = vmul.f32 %v1528, %v1528
  %v1663 = vmul.f32 %v1529, %v1529
  %v1664 = vmul.f32 %v1530, %v1530
  %v1665 = vmul.f32 %v1531, %v1531
  %v1666 = vmul.f32 %v1532, %v1532
  %v1667 = vmul.f32 %v1533, %v1533
  %v1668 = vmul.f32 %v1534, %v1534
  %v1669 = vmul.f32 %v1535, %v1535
  %v1670 = vmul.f32 %v1536, %v1536
  %v1671 = vmul.f32 %v1537, %v1537
  %v1672 = vmul.f32 %v1538, %v1538
  %v1673 = vmul.f32 %v1539, %v1539
  %v1674 = vmul.f32 %v1540, %v1540
  %v1675 = vmul.f32 %v1541, %v1541
  %v1676 = vmul.f32 %v1542, %v1542
  %v1677 = vmul.f32 %v1543, %v1543
  %v1678 = vmul.f32 %v1544, %v1544
  %v1679 = vmul.f32 %v1545, %v1545
  %v1680 = vmul.f32 %v1546, %v1546
  %v1681 = vmul.f32 %v1547, %v1547
  %v1682 = vmul.f32 %v1548, %v1548
  %v1683 = vmul.f32 %v1549, %v1549
  %v1684 = vmul.f32 %v1550, %v1550
  %v1685 = vmul.f32 %v1551, %v1551
  %v1686 = vmul.f32 %v1552, %v1552
  %v1687 = vmul.f32 %v1553, %v1553
  %v1688 = vmul.f32 %v1554, %v1554
  %v1689 = vmul.f32 %v1555, %v1555
  %v1690 = vadd.f32 %v1626, %v1627
  %v1691 = vadd.f32 %v1690, %v1628
  %v1692 = vadd.f32 %v1691, %v1629
  %v1693 = vadd.f32 %v1692, %v1630
  %v1694 = vadd.f32 %v1693, %v1631
  %v1695 = vadd.f32 %v1694, %v1632
  %v1696 = vadd.f32 %v1695, %v1633
  %v1697 = vadd.f32 %v1696, %v1634
  %v1698 = vadd.f32 %v1697, %v1635
  %v1699 = vadd.f32 %v1698, %v1636
  %v1700 = vadd.f32 %v1699, %v1637
  %v1701 = vadd.f32 %v1700, %v1638
  %v1702 = vadd.f32 %v1701, %v1639
  %v1703 = vadd.f32 %v1702, %v1640
  %v1704 = vadd.f32 %v1703, %v1641
  %v1705 = vadd.f32 %v1704, %v1642
  %v1706 = vadd.f32 %v1705, %v1643
  %v1707 = vadd.f32 %v1706, %v1644
  %v1708 = vadd.f32 %v1707, %v1645
  %v1709 = vadd.f32 %v1708, %v1646
  %v1710 = vadd.f32 %v1709, %v1647
  %v1711 = vadd.f32 %v1710, %v1648
  %v1712 = vadd.f32 %v1711, %v1649
  %v1713 = vadd.f32 %v1712, %v1650
  %v1714 = vadd.f32 %v1713, %v1651
  %v1715 = vadd.f32 %v1714, %v1652
  %v1716 = vadd.f32 %v1715, %v1653
  %v1717 = vadd.f32 %v1716, %v1654
  %v1718 = vadd.f32 %v1717, %v1655
  %v1719 = vadd.f32 %v1718, %v1656
  %v1720 = vadd.f32 %v1719, %v1657
  %v1721 = vadd.f32 %v1720, %v1658
  %v1722 = vadd.f32 %v1721, %v1659
  %v1723 = vadd.f32 %v1722, %v1660
  %v1724 = vadd.f32 %v1723, %v1661
  %v1725 = vadd.f32 %v1724, %v1662
  %v1726 = vadd.f32 %v1725, %v1663
  %v1727 = vadd.f32 %v1726, %v1664
  %v1728 = vadd.f32 %v1727, %v1665
  %v1729 = vadd.f32 %v1728, %v1666
  %v1730 = vadd.f32 %v1729, %v1667
  %v1731 = vadd.f32 %v1730, %v1668
  %v1732 = vadd.f32 %v1731, %v1669
  %v1733 = vadd.f32 %v1732, %v1670
  %v1734 = vadd.f32 %v1733, %v1671
  %v1735 = vadd.f32 %v1734, %v1672
  %v1736 = vadd.f32 %v1735, %v1673
  %v1737 = vadd.f32 %v1736, %v1674
  %v1738 = vadd.f32 %v1737, %v1675
  %v1739 = vadd.f32 %v1738, %v1676
  %v1740 = vadd.f32 %v1739, %v1677
  %v1741 = vadd.f32 %v1740, %v1678
  %v1742 = vadd.f32 %v1741, %v1679
  %v1743 = vadd.f32 %v1742, %v1680
  %v1744 = vadd.f32 %v1743, %v1681
  %v1745 = vadd.f32 %v1744, %v1682
  %v1746 = vadd.f32 %v1745, %v1683
  %v1747 = vadd.f32 %v1746, %v1684
  %v1748 = vadd.f32 %v1747, %v1685
  %v1749 = vadd.f32 %v1748, %v1686
  %v1750 = vadd.f32 %v1749, %v1687
  %v1751 = vadd.f32 %v1750, %v1688
  %v1752 = vadd.f32 %v1751, %v1689
  %v1753 = vrot.slane %v1752, 4
  %v1754 = vadd.f32 %v1752, %v1753
  %v1755 = vrot.slane %v1754, 2
  %v1756 = vadd.f32 %v1754, %v1755
  %v1757 = vrot.slane %v1756, 1
  %v1758 = vadd.f32 %v1756, %v1757
  %1759 = vst [vmem:[%s4] sm:$0x1] %v1758
  %v1760 = vmax.f32 %v1492, %v1500
  %v1761 = vmax.f32 %v1493, %v1501
  %v1762 = vmax.f32 %v1494, %v1502
  %v1763 = vmax.f32 %v1495, %v1503
  %v1764 = vmax.f32 %v1496, %v1504
  %v1765 = vmax.f32 %v1497, %v1505
  %v1766 = vmax.f32 %v1498, %v1506
  %v1767 = vmax.f32 %v1499, %v1507
  %v1768 = vmax.f32 %v1508, %v1516
  %v1769 = vmax.f32 %v1509, %v1517
  %v1770 = vmax.f32 %v1510, %v1518
  %v1771 = vmax.f32 %v1511, %v1519
  %v1772 = vmax.f32 %v1512, %v1520
  %v1773 = vmax.f32 %v1513, %v1521
  %v1774 = vmax.f32 %v1514, %v1522
  %v1775 = vmax.f32 %v1515, %v1523
  %v1776 = vmax.f32 %v1760, %v1768
  %v1777 = vmax.f32 %v1761, %v1769
  %v1778 = vmax.f32 %v1762, %v1770
  %v1779 = vmax.f32 %v1763, %v1771
  %v1780 = vmax.f32 %v1764, %v1772
  %v1781 = vmax.f32 %v1765, %v1773
  %v1782 = vmax.f32 %v1766, %v1774
  %v1783 = vmax.f32 %v1767, %v1775
  %v1784 = vpack.c.bf16 %v1777, %v1776
  %v1785 = vpack.c.bf16 %v1779, %v1778
  %v1786 = vpack.c.bf16 %v1781, %v1780
  %v1787 = vpack.c.bf16 %v1783, %v1782
  %v1792 = vunpack.c.l.b16 %v1784
  %v1793 = vunpack.c.h.b16 %v1784
  %v1794 = vunpack.c.l.b16 %v1785
  %v1795 = vunpack.c.h.b16 %v1785
  %v1796 = vunpack.c.l.b16 %v1786
  %v1797 = vunpack.c.h.b16 %v1786
  %v1798 = vunpack.c.l.b16 %v1787
  %v1799 = vunpack.c.h.b16 %v1787
  %v1800 = vpack.c.b16 %v1792, %v1792
  %v1801 = vpack.c.b16 %v1793, %v1793
  %v1802 = vpack.c.b16 %v1794, %v1794
  %v1803 = vpack.c.b16 %v1795, %v1795
  %v1804 = vpack.c.b16 %v1796, %v1796
  %v1805 = vpack.c.b16 %v1797, %v1797
  %v1806 = vpack.c.b16 %v1798, %v1798
  %v1807 = vpack.c.b16 %v1799, %v1799
  %1816 = vst [vmem:[%s5] sm:$0xf] %v1800
  %1817 = vst [vmem:[%s5 + $0x4] sm:$0xf] %v1801
  %1818 = vst [vmem:[%s5 + $0x8] sm:$0xf] %v1802
  %1819 = vst [vmem:[%s5 + $0xc] sm:$0xf] %v1803
  %1820 = vst [vmem:[%s5 + $0x10] sm:$0xf] %v1804
  %1821 = vst [vmem:[%s5 + $0x14] sm:$0xf] %v1805
  %1822 = vst [vmem:[%s5 + $0x18] sm:$0xf] %v1806
  %1823 = vst [vmem:[%s5 + $0x1c] sm:$0xf] %v1807
  %v1824 = vmin.f32 %v1492, %v1500
  %v1825 = vmin.f32 %v1493, %v1501
  %v1826 = vmin.f32 %v1494, %v1502
  %v1827 = vmin.f32 %v1495, %v1503
  %v1828 = vmin.f32 %v1496, %v1504
  %v1829 = vmin.f32 %v1497, %v1505
  %v1830 = vmin.f32 %v1498, %v1506
  %v1831 = vmin.f32 %v1499, %v1507
  %v1832 = vmin.f32 %v1508, %v1516
  %v1833 = vmin.f32 %v1509, %v1517
  %v1834 = vmin.f32 %v1510, %v1518
  %v1835 = vmin.f32 %v1511, %v1519
  %v1836 = vmin.f32 %v1512, %v1520
  %v1837 = vmin.f32 %v1513, %v1521
  %v1838 = vmin.f32 %v1514, %v1522
  %v1839 = vmin.f32 %v1515, %v1523
  %v1840 = vmin.f32 %v1824, %v1832
  %v1841 = vmin.f32 %v1825, %v1833
  %v1842 = vmin.f32 %v1826, %v1834
  %v1843 = vmin.f32 %v1827, %v1835
  %v1844 = vmin.f32 %v1828, %v1836
  %v1845 = vmin.f32 %v1829, %v1837
  %v1846 = vmin.f32 %v1830, %v1838
  %v1847 = vmin.f32 %v1831, %v1839
  %v1848 = vpack.c.bf16 %v1841, %v1840
  %v1849 = vpack.c.bf16 %v1843, %v1842
  %v1850 = vpack.c.bf16 %v1845, %v1844
  %v1851 = vpack.c.bf16 %v1847, %v1846
  %v1856 = vunpack.c.l.b16 %v1848
  %v1857 = vunpack.c.h.b16 %v1848
  %v1858 = vunpack.c.l.b16 %v1849
  %v1859 = vunpack.c.h.b16 %v1849
  %v1860 = vunpack.c.l.b16 %v1850
  %v1861 = vunpack.c.h.b16 %v1850
  %v1862 = vunpack.c.l.b16 %v1851
  %v1863 = vunpack.c.h.b16 %v1851
  %v1864 = vpack.c.b16 %v1856, %v1856
  %v1865 = vpack.c.b16 %v1857, %v1857
  %v1866 = vpack.c.b16 %v1858, %v1858
  %v1867 = vpack.c.b16 %v1859, %v1859
  %v1868 = vpack.c.b16 %v1860, %v1860
  %v1869 = vpack.c.b16 %v1861, %v1861
  %v1870 = vpack.c.b16 %v1862, %v1862
  %v1871 = vpack.c.b16 %v1863, %v1863
  %1880 = vst [vmem:[%s6] sm:$0xf] %v1864
  %1881 = vst [vmem:[%s6 + $0x4] sm:$0xf] %v1865
  %1882 = vst [vmem:[%s6 + $0x8] sm:$0xf] %v1866
  %1883 = vst [vmem:[%s6 + $0xc] sm:$0xf] %v1867
  %1884 = vst [vmem:[%s6 + $0x10] sm:$0xf] %v1868
  %1885 = vst [vmem:[%s6 + $0x14] sm:$0xf] %v1869
  %1886 = vst [vmem:[%s6 + $0x18] sm:$0xf] %v1870
  %1887 = vst [vmem:[%s6 + $0x1c] sm:$0xf] %v1871
  %v1888 = vmax.f32 %v1524, %v1532
  %v1889 = vmax.f32 %v1525, %v1533
  %v1890 = vmax.f32 %v1526, %v1534
  %v1891 = vmax.f32 %v1527, %v1535
  %v1892 = vmax.f32 %v1528, %v1536
  %v1893 = vmax.f32 %v1529, %v1537
  %v1894 = vmax.f32 %v1530, %v1538
  %v1895 = vmax.f32 %v1531, %v1539
  %v1896 = vmax.f32 %v1540, %v1548
  %v1897 = vmax.f32 %v1541, %v1549
  %v1898 = vmax.f32 %v1542, %v1550
  %v1899 = vmax.f32 %v1543, %v1551
  %v1900 = vmax.f32 %v1544, %v1552
  %v1901 = vmax.f32 %v1545, %v1553
  %v1902 = vmax.f32 %v1546, %v1554
  %v1903 = vmax.f32 %v1547, %v1555
  %v1904 = vmax.f32 %v1888, %v1896
  %v1905 = vmax.f32 %v1889, %v1897
  %v1906 = vmax.f32 %v1890, %v1898
  %v1907 = vmax.f32 %v1891, %v1899
  %v1908 = vmax.f32 %v1892, %v1900
  %v1909 = vmax.f32 %v1893, %v1901
  %v1910 = vmax.f32 %v1894, %v1902
  %v1911 = vmax.f32 %v1895, %v1903
  %v1912 = vpack.c.bf16 %v1905, %v1904
  %v1913 = vpack.c.bf16 %v1907, %v1906
  %v1914 = vpack.c.bf16 %v1909, %v1908
  %v1915 = vpack.c.bf16 %v1911, %v1910
  %v1920 = vunpack.c.l.b16 %v1912
  %v1921 = vunpack.c.h.b16 %v1912
  %v1922 = vunpack.c.l.b16 %v1913
  %v1923 = vunpack.c.h.b16 %v1913
  %v1924 = vunpack.c.l.b16 %v1914
  %v1925 = vunpack.c.h.b16 %v1914
  %v1926 = vunpack.c.l.b16 %v1915
  %v1927 = vunpack.c.h.b16 %v1915
  %v1928 = vpack.c.b16 %v1920, %v1920
  %v1929 = vpack.c.b16 %v1921, %v1921
  %v1930 = vpack.c.b16 %v1922, %v1922
  %v1931 = vpack.c.b16 %v1923, %v1923
  %v1932 = vpack.c.b16 %v1924, %v1924
  %v1933 = vpack.c.b16 %v1925, %v1925
  %v1934 = vpack.c.b16 %v1926, %v1926
  %v1935 = vpack.c.b16 %v1927, %v1927
  %s1944 = scalar_lea.vmem %s5, 32
  %1945 = vst [vmem:[%s1944] sm:$0xf] %v1928
  %1946 = vst [vmem:[%s1944 + $0x4] sm:$0xf] %v1929
  %1947 = vst [vmem:[%s1944 + $0x8] sm:$0xf] %v1930
  %1948 = vst [vmem:[%s1944 + $0xc] sm:$0xf] %v1931
  %1949 = vst [vmem:[%s1944 + $0x10] sm:$0xf] %v1932
  %1950 = vst [vmem:[%s1944 + $0x14] sm:$0xf] %v1933
  %1951 = vst [vmem:[%s1944 + $0x18] sm:$0xf] %v1934
  %1952 = vst [vmem:[%s1944 + $0x1c] sm:$0xf] %v1935
  %v1953 = vmin.f32 %v1524, %v1532
  %v1954 = vmin.f32 %v1525, %v1533
  %v1955 = vmin.f32 %v1526, %v1534
  %v1956 = vmin.f32 %v1527, %v1535
  %v1957 = vmin.f32 %v1528, %v1536
  %v1958 = vmin.f32 %v1529, %v1537
  %v1959 = vmin.f32 %v1530, %v1538
  %v1960 = vmin.f32 %v1531, %v1539
  %v1961 = vmin.f32 %v1540, %v1548
  %v1962 = vmin.f32 %v1541, %v1549
  %v1963 = vmin.f32 %v1542, %v1550
  %v1964 = vmin.f32 %v1543, %v1551
  %v1965 = vmin.f32 %v1544, %v1552
  %v1966 = vmin.f32 %v1545, %v1553
  %v1967 = vmin.f32 %v1546, %v1554
  %v1968 = vmin.f32 %v1547, %v1555
  %v1969 = vmin.f32 %v1953, %v1961
  %v1970 = vmin.f32 %v1954, %v1962
  %v1971 = vmin.f32 %v1955, %v1963
  %v1972 = vmin.f32 %v1956, %v1964
  %v1973 = vmin.f32 %v1957, %v1965
  %v1974 = vmin.f32 %v1958, %v1966
  %v1975 = vmin.f32 %v1959, %v1967
  %v1976 = vmin.f32 %v1960, %v1968
  %v1977 = vpack.c.bf16 %v1970, %v1969
  %v1978 = vpack.c.bf16 %v1972, %v1971
  %v1979 = vpack.c.bf16 %v1974, %v1973
  %v1980 = vpack.c.bf16 %v1976, %v1975
  %v1985 = vunpack.c.l.b16 %v1977
  %v1986 = vunpack.c.h.b16 %v1977
  %v1987 = vunpack.c.l.b16 %v1978
  %v1988 = vunpack.c.h.b16 %v1978
  %v1989 = vunpack.c.l.b16 %v1979
  %v1990 = vunpack.c.h.b16 %v1979
  %v1991 = vunpack.c.l.b16 %v1980
  %v1992 = vunpack.c.h.b16 %v1980
  %v1993 = vpack.c.b16 %v1985, %v1985
  %v1994 = vpack.c.b16 %v1986, %v1986
  %v1995 = vpack.c.b16 %v1987, %v1987
  %v1996 = vpack.c.b16 %v1988, %v1988
  %v1997 = vpack.c.b16 %v1989, %v1989
  %v1998 = vpack.c.b16 %v1990, %v1990
  %v1999 = vpack.c.b16 %v1991, %v1991
  %v2000 = vpack.c.b16 %v1992, %v1992
  %s2009 = scalar_lea.vmem %s6, 32
  %2010 = vst [vmem:[%s2009] sm:$0xf] %v1993
  %2011 = vst [vmem:[%s2009 + $0x4] sm:$0xf] %v1994
  %2012 = vst [vmem:[%s2009 + $0x8] sm:$0xf] %v1995
  %2013 = vst [vmem:[%s2009 + $0xc] sm:$0xf] %v1996
  %2014 = vst [vmem:[%s2009 + $0x10] sm:$0xf] %v1997
  %2015 = vst [vmem:[%s2009 + $0x14] sm:$0xf] %v1998
  %2016 = vst [vmem:[%s2009 + $0x18] sm:$0xf] %v1999
  %2017 = vst [vmem:[%s2009 + $0x1c] sm:$0xf] %v2000
  // Predicated region
  $region14: #{conv_block_forward.1} parent=0 // pred_check
    _
  $region15: #{conv_block_forward.1} parent=0 // pred_check_branch
    %2019 = sbr.rel (0) target = $region17
  $region16: #{conv_block_forward.1} parent=0 // pred_region
    _
  $region17: #{conv_block_forward.1} parent=0 // pred_fallthru
    _
  // Predicated region
  $region18: #{conv_block_forward.1} parent=0 // pred_check
    _
  $region19: #{conv_block_forward.1} parent=0 // pred_check_branch
    %2021 = sbr.rel (0) target = $region21
  $region20: #{conv_block_forward.1} parent=0 // pred_region
    _
  $region21: #{conv_block_forward.1} parent=0 // pred_fallthru
    _
  // Predicated region
  $region22: #{conv_block_forward.1} parent=0 // pred_check
    _
  $region23: #{conv_block_forward.1} parent=0 // pred_check_branch
    %2023 = sbr.rel (0) target = $region25
  $region24: #{conv_block_forward.1} parent=0 // pred_region
    _
  $region25: #{conv_block_forward.1} parent=0 // pred_fallthru
    _
  // Predicated region
  $region26: #{conv_block_forward.1} parent=0 // pred_check
    _
  $region27: #{conv_block_forward.1} parent=0 // pred_check_branch
    %2025 = sbr.rel (0) target = $region29
  $region28: #{conv_block_forward.1} parent=0 // pred_region
    _
  $region29: #{conv_block_forward.1} parent=0 // pred_fallthru
    _
  // Predicated region
  $region30: #{conv_block_forward.1} parent=0 // pred_check
    _
  $region31: #{conv_block_forward.1} parent=0 // pred_check_branch
    %2027 = sbr.rel (0) target = $region33
  $region32: #{conv_block_forward.1} parent=0 // pred_region
    _
  $region33: #{conv_block_forward.1} parent=0 // pred_fallthru
    _
  // Predicated region
  $region34: #{conv_block_forward.1} parent=0 // pred_check
    _
  $region35: #{conv_block_forward.1} parent=0 // pred_check_branch
    %2029 = sbr.rel (0) target = $region37
  $region36: #{conv_block_forward.1} parent=0 // pred_region
    _
  $region37: #{conv_block_forward.1} parent=0 // pred_fallthru
    _
  // Predicated region
  $region38: #{conv_block_forward.1} parent=0 // pred_check
    _
  $region39: #{conv_block_forward.1} parent=0 // pred_check_branch
    %2031 = sbr.rel (0) target = $region41
  $region40: #{conv_block_forward.1} parent=0 // pred_region
    _
  $region41: #{conv_block_forward.1} parent=0 // pred_fallthru
    _
  // Predicated region
  $region42: #{conv_block_forward.1} parent=0 // pred_check
    _
  $region43: #{conv_block_forward.1} parent=0 // pred_check_branch
    %2033 = sbr.rel (0) target = $region45
  $region44: #{conv_block_forward.1} parent=0 // pred_region
    _
  $region45: #{conv_block_forward.1} parent=0 // pred_fallthru
    _

</llo_original>
